<compile_context>
chip_gen: v7x
topology: tpu7x:2x2x1
jax: 0.10.0
libtpu: 0.0.40
codegen_flags: <defaults>
</compile_context>

<pallas_src>
import functools

import jax
import jax.numpy as jnp
from jax.experimental import pallas as pl
from jax.experimental.pallas import tpu as pltpu


def _round_up(x, m):
    return ((x + m - 1) // m) * m


def _supcon_tile_kernel(*refs, temperature, base_temperature, n_rows, n_cols,
                        block_m, block_n, use_labels):
    if use_labels:
        (lab_r_ref, lab_c_ref, a_ref, b_ref,
         loss_ref, m_ref, l_ref, sr_ref, sm_ref) = refs
    else:
        (mask_ref, a_ref, b_ref,
         loss_ref, m_ref, l_ref, sr_ref, sm_ref) = refs

    i = pl.program_id(0)
    j = pl.program_id(1)
    nj = pl.num_programs(1)

    # Reset per-row-block running statistics at the first column tile.
    @pl.when(j == 0)
    def _():
        m_ref[...] = jnp.full((block_m, 1), -1e30, jnp.float32)
        l_ref[...] = jnp.zeros((block_m, 1), jnp.float32)
        sr_ref[...] = jnp.zeros((block_m, 1), jnp.float32)
        sm_ref[...] = jnp.zeros((block_m, 1), jnp.float32)

    # Raw logits for this tile. The anchor operand is pre-scaled by 1/temperature on the
    # host, so `raw` already equals anchor_dot_contrast / temperature. Contract over the
    # lane-major feature axis of both operands -> no transpose, MXU with f32 accumulation.
    raw = jax.lax.dot_general(
        a_ref[...], b_ref[...],
        dimension_numbers=(((1,), (1,)), ((), ())),
        preferred_element_type=jnp.float32)                       # [bm, bn] f32

    # Global anchor / contrast indices of this tile (for diagonal + padding handling).
    row_ids = jax.lax.broadcasted_iota(jnp.int32, (block_m, 1), 0) + i * block_m
    col_ids = jax.lax.broadcasted_iota(jnp.int32, (1, block_n), 1) + j * block_n
    col_valid = (col_ids < n_cols).astype(jnp.float32)            # [1, bn]
    col_bias = (col_valid - 1.0) * 1e30                           # 0 valid / -1e30 padded
    lmask = (row_ids != col_ids).astype(jnp.float32) * col_valid  # logits_mask tile

    if use_labels:
        pmask = (lab_r_ref[...] == lab_c_ref[...]).astype(jnp.float32) * lmask
    else:
        pmask = mask_ref[...] * lmask

    # Online softmax denominator over column tiles (padded cols excluded via bias,
    # the self-contrast diagonal excluded via lmask — matches the reference).
    raw_b = raw + col_bias
    m_prev = m_ref[...]
    m_new = jnp.maximum(m_prev, jnp.max(raw_b, axis=1, keepdims=True))
    corr = jnp.exp(m_prev - m_new)
    e = jnp.exp(raw_b - m_new) * lmask
    l_ref[...] = corr * l_ref[...] + jnp.sum(e, axis=1, keepdims=True)
    m_ref[...] = m_new
    # Linear accumulators: the row-max shift cancels analytically, so no rescaling needed.
    sr_ref[...] += jnp.sum(pmask * raw, axis=1, keepdims=True)
    sm_ref[...] += jnp.sum(pmask, axis=1, keepdims=True)

    # Finalize this row block after the last column tile.
    @pl.when(j == nj - 1)
    def _():
        row_valid = (row_ids < n_rows).astype(jnp.float32)        # [bm, 1]
        log_denom = m_ref[...] + jnp.log(l_ref[...])
        # Guard 0/0 for padded rows (and pathological positive-free anchors).
        sm_safe = jnp.maximum(sm_ref[...], 1.0)
        mean_log_prob_pos = sr_ref[...] / sm_safe - log_denom
        loss_rows = -(temperature / base_temperature) * mean_log_prob_pos
        loss_ref[...] = loss_rows * row_valid


def supcon_loss(features, labels=None, mask=None, *, temperature=0.07,
                contrast_mode="all", base_temperature=0.07,
                mxu_dtype=jnp.bfloat16, block_m=None, block_n=None):
    """JAX/Pallas equivalent of SupConLoss.forward (forward value only)."""
    if features.ndim < 3:
        raise ValueError("`features` needs to be [bsz, n_views, ...]")
    if features.ndim > 3:
        features = features.reshape(features.shape[0], features.shape[1], -1)
    bsz, n_views, dim = features.shape

    if labels is not None and mask is not None:
        raise ValueError("Cannot define both `labels` and `mask`")

    use_labels = mask is None
    if use_labels:
        if labels is None:
            lab = jnp.arange(bsz, dtype=jnp.int32)   # eye(bsz) == unique per-sample labels
        else:
            lab = jnp.asarray(labels).reshape(-1).astype(jnp.int32)
            if lab.shape[0] != bsz:
                raise ValueError("Num of labels does not match num of features")
    else:
        base_mask = jnp.asarray(mask, dtype=jnp.float32)

    if contrast_mode == "one":
        anchor_count = 1
    elif contrast_mode == "all":
        anchor_count = n_views
    else:
        raise ValueError(f"Unknown mode: {contrast_mode}")

    n_cols = n_views * bsz          # contrast rows
    n_rows = anchor_count * bsz     # anchor rows

    # contrast_feature = torch.cat(torch.unbind(features, dim=1)): views-major row order.
    cf = jnp.transpose(features.astype(jnp.float32), (1, 0, 2)).reshape(n_cols, dim)
    af = cf[:n_rows]                # 'all': everything; 'one': view 0 of each sample

    # Lane-aligned tile sizes; pad everything to MXU/(8,128)-friendly shapes.
    if block_m is None:
        block_m = 256 if n_rows >= 512 else 128
    if block_n is None:
        block_n = 256 if n_cols >= 512 else 128
    m_pad = _round_up(n_rows, block_m)
    c_pad = _round_up(n_cols, block_n)
    d_pad = _round_up(dim, 128)

    # Fold 1/temperature into the anchor operand once; cast operands for the MXU.
    a_scaled = (af * (1.0 / float(temperature))).astype(mxu_dtype)
    a_scaled = jnp.pad(a_scaled, ((0, m_pad - n_rows), (0, d_pad - dim)))
    b_feat = jnp.pad(cf.astype(mxu_dtype), ((0, c_pad - n_cols), (0, d_pad - dim)))

    grid = (m_pad // block_m, c_pad // block_n)

    kernel = functools.partial(
        _supcon_tile_kernel,
        temperature=float(temperature),
        base_temperature=float(base_temperature),
        n_rows=n_rows, n_cols=n_cols,
        block_m=block_m, block_n=block_n,
        use_labels=use_labels)

    a_spec = pl.BlockSpec((block_m, d_pad), lambda i, j: (i, 0))
    b_spec = pl.BlockSpec((block_n, d_pad), lambda i, j: (j, 0))

    if use_labels:
        col_lab = jnp.tile(lab, n_views)
        row_lab = jnp.pad(col_lab[:n_rows], (0, m_pad - n_rows)).reshape(m_pad, 1)
        col_lab = jnp.pad(col_lab, (0, c_pad - n_cols)).reshape(1, c_pad)
        inputs = (row_lab, col_lab, a_scaled, b_feat)
        in_specs = [
            pl.BlockSpec((block_m, 1), lambda i, j: (i, 0)),
            pl.BlockSpec((1, block_n), lambda i, j: (0, j)),
            a_spec, b_spec,
        ]
    else:
        full_mask = jnp.tile(base_mask, (anchor_count, n_views))
        full_mask = jnp.pad(full_mask, ((0, m_pad - n_rows), (0, c_pad - n_cols)))
        inputs = (full_mask, a_scaled, b_feat)
        in_specs = [
            pl.BlockSpec((block_m, block_n), lambda i, j: (i, j)),
            a_spec, b_spec,
        ]

    # VMEM budget: double-buffered input tiles + f32 tile temporaries, with headroom.
    itemsize = jnp.dtype(mxu_dtype).itemsize
    vmem_est = 2 * 2 * (block_m + block_n) * d_pad * itemsize
    vmem_est += 10 * block_m * block_n * 4
    if not use_labels:
        vmem_est += 2 * block_m * block_n * 4
    vmem_limit = int(min(64 * 1024 * 1024, max(32 * 1024 * 1024, 2 * vmem_est)))

    per_row_loss = pl.pallas_call(
        kernel,
        out_shape=jax.ShapeDtypeStruct((m_pad, 1), jnp.float32),
        grid_spec=pltpu.PrefetchScalarGridSpec(
            num_scalar_prefetch=0,
            grid=grid,
            in_specs=in_specs,
            out_specs=pl.BlockSpec((block_m, 1), lambda i, j: (i, 0)),
            scratch_shapes=[pltpu.VMEM((block_m, 1), jnp.float32) for _ in range(4)],
        ),
        compiler_params=pltpu.CompilerParams(
            dimension_semantics=("parallel", "arbitrary"),
            vmem_limit_bytes=vmem_limit),
    )(*inputs)

    # loss.view(anchor_count, batch_size).mean(); padded rows were written as 0.
    return jnp.sum(per_row_loss) / n_rows


def _supcon_loss_ref(features, labels=None, mask=None, *, temperature=0.07,
                     base_temperature=0.07, contrast_mode="all",
                     matmul_dtype=jnp.float32):
    """Pure-JAX reference mirroring the PyTorch forward."""
    bsz, n_views = features.shape[0], features.shape[1]
    feats = features.reshape(bsz, n_views, -1).astype(jnp.float32)
    if labels is None and mask is None:
        base_mask = jnp.eye(bsz, dtype=jnp.float32)
    elif labels is not None:
        lab = labels.reshape(-1, 1)
        base_mask = (lab == lab.T).astype(jnp.float32)
    else:
        base_mask = mask.astype(jnp.float32)
    cf = jnp.transpose(feats, (1, 0, 2)).reshape(n_views * bsz, -1)
    if contrast_mode == "one":
        af, anchor_count = cf[:bsz], 1
    else:
        af, anchor_count = cf, n_views
    a = (af * (1.0 / temperature)).astype(matmul_dtype)
    b = cf.astype(matmul_dtype)
    logits = jnp.dot(a, b.T, preferred_element_type=jnp.float32)
    logits = logits - jnp.max(logits, axis=1, keepdims=True)
    n_a, n_c = anchor_count * bsz, n_views * bsz
    m = jnp.tile(base_mask, (anchor_count, n_views))
    lmask = 1.0 - jnp.eye(n_a, n_c, dtype=jnp.float32)
    m = m * lmask
    exp_logits = jnp.exp(logits) * lmask
    log_prob = logits - jnp.log(exp_logits.sum(1, keepdims=True))
    mean_log_prob_pos = (m * log_prob).sum(1) / m.sum(1)
    return (-(temperature / base_temperature) * mean_log_prob_pos).mean()


if __name__ == "__main__":
    key = jax.random.PRNGKey(0)

    def make_inputs(k, bsz, n_views, dim, n_classes):
        kf, kl = jax.random.split(k)
        f = jax.random.normal(kf, (bsz, n_views, dim), dtype=jnp.float32)
        f = f / jnp.linalg.norm(f, axis=-1, keepdims=True)
        lab = jax.random.randint(kl, (bsz,), 0, n_classes)
        return f, lab

    def check(name, got, want, tol):
        got, want = float(got), float(want)
        assert abs(got - want) <= tol * (1.0 + abs(want)), (name, got, want)

    k1, k2, k3, k4 = jax.random.split(key, 4)

    # 1) small single-tile case, labels path: exact-f32 MXU and default bf16 MXU.
    f1, l1 = make_inputs(k1, 8, 2, 32, 3)
    ref1 = _supcon_loss_ref(f1, labels=l1)
    out1_f32 = jax.block_until_ready(supcon_loss(f1, labels=l1, mxu_dtype=jnp.float32))
    check("case1/f32", out1_f32, ref1, 1e-4)
    ref1_bf16 = _supcon_loss_ref(f1, labels=l1, matmul_dtype=jnp.bfloat16)
    out1_bf16 = jax.block_until_ready(supcon_loss(f1, labels=l1))  # bf16 MXU default
    check("case1/bf16", out1_bf16, ref1_bf16, 1e-3)

    # 2) multi-tile grid with row/col/feature padding (N=144 -> 2x2 tiles of 128).
    f2, l2 = make_inputs(k2, 72, 2, 40, 5)
    ref2 = _supcon_loss_ref(f2, labels=l2)
    out2 = jax.block_until_ready(supcon_loss(f2, labels=l2, mxu_dtype=jnp.float32))
    check("case2/f32", out2, ref2, 1e-4)

    # 3) labels=None (SimCLR-style eye mask).
    f3, _ = make_inputs(k3, 8, 2, 32, 3)
    ref3 = _supcon_loss_ref(f3)
    out3 = jax.block_until_ready(supcon_loss(f3, mxu_dtype=jnp.float32))
    check("case3/eye", out3, ref3, 1e-4)

    # 4) explicit user-provided mask path.
    f4, _ = make_inputs(k4, 8, 2, 32, 3)
    rnd = jax.random.uniform(jax.random.fold_in(k4, 7), (8, 8)) < 0.4
    m4 = (rnd | jnp.eye(8, dtype=bool)).astype(jnp.float32)
    ref4 = _supcon_loss_ref(f4, mask=m4)
    out4 = jax.block_until_ready(supcon_loss(f4, mask=m4, mxu_dtype=jnp.float32))
    check("case4/mask", out4, ref4, 1e-4)

    # 5) contrast_mode='one'.
    ref5 = _supcon_loss_ref(f1, labels=l1, contrast_mode="one")
    out5 = jax.block_until_ready(
        supcon_loss(f1, labels=l1, contrast_mode="one", mxu_dtype=jnp.float32))
    check("case5/one", out5, ref5, 1e-4)

    print("KERNEL_OK")
</pallas_src>

<mosaic_0001>
module attributes {stable_mosaic.version = 11 : i64} {
  func.func @_supcon_tile_kernel(%arg0: i32, %arg1: i32, %arg2: memref<128x1xi32, #tpu.memory_space<vmem>>, %arg3: memref<1x128xi32, #tpu.memory_space<vmem>>, %arg4: memref<128x128xf32, #tpu.memory_space<vmem>>, %arg5: memref<128x128xf32, #tpu.memory_space<vmem>>, %arg6: memref<128x1xf32, #tpu.memory_space<vmem>>, %arg7: memref<128x1xf32, #tpu.memory_space<vmem>>, %arg8: memref<128x1xf32, #tpu.memory_space<vmem>>, %arg9: memref<128x1xf32, #tpu.memory_space<vmem>>, %arg10: memref<128x1xf32, #tpu.memory_space<vmem>>) attributes {dimension_semantics = [#tpu.dimension_semantics<parallel>, #tpu.dimension_semantics<arbitrary>], iteration_bounds = array<i64: 1, 1>, scalar_prefetch = 0 : i64, scratch_operands = 4 : i64, tpu.core_type = #tpu.core_type<tc>, window_params = [{transform_indices = @transform_0, window_bounds = array<i64: 128, 1>}, {transform_indices = @transform_1, window_bounds = array<i64: 1, 128>}, {transform_indices = @transform_2, window_bounds = array<i64: 128, 128>}, {transform_indices = @transform_3, window_bounds = array<i64: 128, 128>}, {transform_indices = @transform_4, window_bounds = array<i64: 128, 1>}]} {
    %c0_i32 = arith.constant 0 : i32
    %0 = arith.cmpi eq, %arg1, %c0_i32 : i32
    %1 = arith.extui %0 : i1 to i32
    %c0_i32_0 = arith.constant 0 : i32
    %2 = arith.cmpi ne, %1, %c0_i32_0 : i32
    scf.if %2 {
      %cst_33 = arith.constant -1.000000e+30 : f32
      %70 = vector.broadcast %cst_33 : f32 to vector<128x1xf32>
      %c0_34 = arith.constant 0 : index
      %c0_35 = arith.constant 0 : index
      %71 = vector.load %arg7[%c0_34, %c0_35] : memref<128x1xf32, #tpu.memory_space<vmem>>, vector<128x1xf32>
      tpu.vector_store %arg7[%c0_34, %c0_35], %70 {strides = array<i32>} : memref<128x1xf32, #tpu.memory_space<vmem>>, vector<128x1xf32>,
      %cst_36 = arith.constant 0.000000e+00 : f32
      %72 = vector.broadcast %cst_36 : f32 to vector<128x1xf32>
      %c0_37 = arith.constant 0 : index
      %c0_38 = arith.constant 0 : index
      %73 = vector.load %arg8[%c0_37, %c0_38] : memref<128x1xf32, #tpu.memory_space<vmem>>, vector<128x1xf32>
      tpu.vector_store %arg8[%c0_37, %c0_38], %72 {strides = array<i32>} : memref<128x1xf32, #tpu.memory_space<vmem>>, vector<128x1xf32>,
      %cst_39 = arith.constant 0.000000e+00 : f32
      %74 = vector.broadcast %cst_39 : f32 to vector<128x1xf32>
      %c0_40 = arith.constant 0 : index
      %c0_41 = arith.constant 0 : index
      %75 = vector.load %arg9[%c0_40, %c0_41] : memref<128x1xf32, #tpu.memory_space<vmem>>, vector<128x1xf32>
      tpu.vector_store %arg9[%c0_40, %c0_41], %74 {strides = array<i32>} : memref<128x1xf32, #tpu.memory_space<vmem>>, vector<128x1xf32>,
      %cst_42 = arith.constant 0.000000e+00 : f32
      %76 = vector.broadcast %cst_42 : f32 to vector<128x1xf32>
      %c0_43 = arith.constant 0 : index
      %c0_44 = arith.constant 0 : index
      %77 = vector.load %arg10[%c0_43, %c0_44] : memref<128x1xf32, #tpu.memory_space<vmem>>, vector<128x1xf32>
      tpu.vector_store %arg10[%c0_43, %c0_44], %76 {strides = array<i32>} : memref<128x1xf32, #tpu.memory_space<vmem>>, vector<128x1xf32>,
    } else {
    }
    %c0 = arith.constant 0 : index
    %c0_1 = arith.constant 0 : index
    %3 = vector.load %arg4[%c0, %c0_1] : memref<128x128xf32, #tpu.memory_space<vmem>>, vector<128x128xf32>
    %c0_2 = arith.constant 0 : index
    %c0_3 = arith.constant 0 : index
    %4 = vector.load %arg5[%c0_2, %c0_3] : memref<128x128xf32, #tpu.memory_space<vmem>>, vector<128x128xf32>
    %cst = arith.constant dense<0.000000e+00> : vector<128x128xf32>
    %5 = tpu.matmul %3, %4, %cst {dimension_numbers = #tpu.dot_dimension_numbers<[1], [1], [0], [0], [0, 0, 1, 0], [], []>} : vector<128x128xf32>, vector<128x128xf32>, vector<128x128xf32> -> vector<128x128xf32>
    %6 = tpu.iota {dimensions = array<i32: 0>} : vector<128x1xi32>
    %c128_i32 = arith.constant 128 : i32
    %7 = arith.muli %arg0, %c128_i32 : i32
    %8 = vector.broadcast %7 : i32 to vector<128x1xi32>
    %9 = arith.addi %6, %8 : vector<128x1xi32>
    %10 = tpu.iota {dimensions = array<i32: 1>} : vector<1x128xi32>
    %c128_i32_4 = arith.constant 128 : i32
    %11 = arith.muli %arg1, %c128_i32_4 : i32
    %12 = vector.broadcast %11 : i32 to vector<1x128xi32>
    %13 = arith.addi %10, %12 : vector<1x128xi32>
    %c16_i32 = arith.constant 16 : i32
    %14 = vector.broadcast %c16_i32 : i32 to vector<1x128xi32>
    %15 = arith.cmpi slt, %13, %14 : vector<1x128xi32>
    %16 = arith.extui %15 : vector<1x128xi1> to vector<1x128xi32>
    %17 = arith.sitofp %16 : vector<1x128xi32> to vector<1x128xf32>
    %cst_5 = arith.constant 1.000000e+00 : f32
    %18 = vector.broadcast %cst_5 : f32 to vector<1x128xf32>
    %19 = arith.subf %17, %18 : vector<1x128xf32>
    %cst_6 = arith.constant 1.000000e+30 : f32
    %20 = vector.broadcast %cst_6 : f32 to vector<1x128xf32>
    %21 = arith.mulf %19, %20 : vector<1x128xf32>
    %22 = vector.broadcast %9 : vector<128x1xi32> to vector<128x128xi32>
    %23 = vector.broadcast %13 : vector<1x128xi32> to vector<128x128xi32>
    %24 = arith.cmpi ne, %22, %23 : vector<128x128xi32>
    %25 = arith.extui %24 : vector<128x128xi1> to vector<128x128xi32>
    %26 = arith.sitofp %25 : vector<128x128xi32> to vector<128x128xf32>
    %27 = vector.broadcast %17 : vector<1x128xf32> to vector<128x128xf32>
    %28 = arith.mulf %26, %27 : vector<128x128xf32>
    %c0_7 = arith.constant 0 : index
    %c0_8 = arith.constant 0 : index
    %29 = vector.load %arg2[%c0_7, %c0_8] : memref<128x1xi32, #tpu.memory_space<vmem>>, vector<128x1xi32>
    %c0_9 = arith.constant 0 : index
    %c0_10 = arith.constant 0 : index
    %30 = vector.load %arg3[%c0_9, %c0_10] : memref<1x128xi32, #tpu.memory_space<vmem>>, vector<1x128xi32>
    %31 = vector.broadcast %29 : vector<128x1xi32> to vector<128x128xi32>
    %32 = vector.broadcast %30 : vector<1x128xi32> to vector<128x128xi32>
    %33 = arith.cmpi eq, %31, %32 : vector<128x128xi32>
    %34 = arith.extui %33 : vector<128x128xi1> to vector<128x128xi32>
    %35 = arith.sitofp %34 : vector<128x128xi32> to vector<128x128xf32>
    %36 = arith.mulf %35, %28 : vector<128x128xf32>
    %37 = vector.broadcast %21 : vector<1x128xf32> to vector<128x128xf32>
    %38 = arith.addf %5, %37 : vector<128x128xf32>
    %c0_11 = arith.constant 0 : index
    %c0_12 = arith.constant 0 : index
    %39 = vector.load %arg7[%c0_11, %c0_12] : memref<128x1xf32, #tpu.memory_space<vmem>>, vector<128x1xf32>
    %cst_13 = arith.constant dense<0xFF800000> : vector<128xf32>
    %40 = vector.multi_reduction <maximumf>, %38, %cst_13 [1] : vector<128x128xf32> to vector<128xf32>
    %41 = vector.shape_cast %40 : vector<128xf32> to vector<128x1xf32>
    %42 = arith.maximumf %39, %41 : vector<128x1xf32>
    %43 = arith.subf %39, %42 : vector<128x1xf32>
    %44 = math.exp %43 : vector<128x1xf32>
    %45 = vector.broadcast %42 : vector<128x1xf32> to vector<128x128xf32>
    %46 = arith.subf %38, %45 : vector<128x128xf32>
    %47 = math.exp %46 : vector<128x128xf32>
    %48 = arith.mulf %47, %28 : vector<128x128xf32>
    %c0_14 = arith.constant 0 : index
    %c0_15 = arith.constant 0 : index
    %49 = vector.load %arg8[%c0_14, %c0_15] : memref<128x1xf32, #tpu.memory_space<vmem>>, vector<128x1xf32>
    %50 = arith.mulf %44, %49 : vector<128x1xf32>
    %cst_16 = arith.constant dense<0.000000e+00> : vector<128xf32>
    %51 = vector.multi_reduction <add>, %48, %cst_16 [1] : vector<128x128xf32> to vector<128xf32>
    %52 = vector.shape_cast %51 : vector<128xf32> to vector<128x1xf32>
    %53 = arith.addf %50, %52 : vector<128x1xf32>
    %c0_17 = arith.constant 0 : index
    %c0_18 = arith.constant 0 : index
    %54 = vector.load %arg8[%c0_17, %c0_18] : memref<128x1xf32, #tpu.memory_space<vmem>>, vector<128x1xf32>
    tpu.vector_store %arg8[%c0_17, %c0_18], %53 {strides = array<i32>} : memref<128x1xf32, #tpu.memory_space<vmem>>, vector<128x1xf32>,
    %c0_19 = arith.constant 0 : index
    %c0_20 = arith.constant 0 : index
    %55 = vector.load %arg7[%c0_19, %c0_20] : memref<128x1xf32, #tpu.memory_space<vmem>>, vector<128x1xf32>
    tpu.vector_store %arg7[%c0_19, %c0_20], %42 {strides = array<i32>} : memref<128x1xf32, #tpu.memory_space<vmem>>, vector<128x1xf32>,
    %c0_21 = arith.constant 0 : index
    %c0_22 = arith.constant 0 : index
    %56 = vector.load %arg9[%c0_21, %c0_22] : memref<128x1xf32, #tpu.memory_space<vmem>>, vector<128x1xf32>
    %57 = arith.mulf %36, %5 : vector<128x128xf32>
    %cst_23 = arith.constant dense<0.000000e+00> : vector<128xf32>
    %58 = vector.multi_reduction <add>, %57, %cst_23 [1] : vector<128x128xf32> to vector<128xf32>
    %59 = vector.shape_cast %58 : vector<128xf32> to vector<128x1xf32>
    %60 = arith.addf %56, %59 : vector<128x1xf32>
    %c0_24 = arith.constant 0 : index
    %c0_25 = arith.constant 0 : index
    %61 = vector.load %arg9[%c0_24, %c0_25] : memref<128x1xf32, #tpu.memory_space<vmem>>, vector<128x1xf32>
    tpu.vector_store %arg9[%c0_24, %c0_25], %60 {strides = array<i32>} : memref<128x1xf32, #tpu.memory_space<vmem>>, vector<128x1xf32>,
    %c0_26 = arith.constant 0 : index
    %c0_27 = arith.constant 0 : index
    %62 = vector.load %arg10[%c0_26, %c0_27] : memref<128x1xf32, #tpu.memory_space<vmem>>, vector<128x1xf32>
    %cst_28 = arith.constant dense<0.000000e+00> : vector<128xf32>
    %63 = vector.multi_reduction <add>, %36, %cst_28 [1] : vector<128x128xf32> to vector<128xf32>
    %64 = vector.shape_cast %63 : vector<128xf32> to vector<128x1xf32>
    %65 = arith.addf %62, %64 : vector<128x1xf32>
    %c0_29 = arith.constant 0 : index
    %c0_30 = arith.constant 0 : index
    %66 = vector.load %arg10[%c0_29, %c0_30] : memref<128x1xf32, #tpu.memory_space<vmem>>, vector<128x1xf32>
    tpu.vector_store %arg10[%c0_29, %c0_30], %65 {strides = array<i32>} : memref<128x1xf32, #tpu.memory_space<vmem>>, vector<128x1xf32>,
    %c0_i32_31 = arith.constant 0 : i32
    %67 = arith.cmpi eq, %arg1, %c0_i32_31 : i32
    %68 = arith.extui %67 : i1 to i32
    %c0_i32_32 = arith.constant 0 : i32
    %69 = arith.cmpi ne, %68, %c0_i32_32 : i32
    scf.if %69 {
      %c16_i32_33 = arith.constant 16 : i32
      %70 = vector.broadcast %c16_i32_33 : i32 to vector<128x1xi32>
      %71 = arith.cmpi slt, %9, %70 : vector<128x1xi32>
      %72 = arith.extui %71 : vector<128x1xi1> to vector<128x1xi32>
      %73 = arith.sitofp %72 : vector<128x1xi32> to vector<128x1xf32>
      %c0_34 = arith.constant 0 : index
      %c0_35 = arith.constant 0 : index
      %74 = vector.load %arg7[%c0_34, %c0_35] : memref<128x1xf32, #tpu.memory_space<vmem>>, vector<128x1xf32>
      %c0_36 = arith.constant 0 : index
      %c0_37 = arith.constant 0 : index
      %75 = vector.load %arg8[%c0_36, %c0_37] : memref<128x1xf32, #tpu.memory_space<vmem>>, vector<128x1xf32>
      %76 = math.log %75 : vector<128x1xf32>
      %77 = arith.addf %74, %76 : vector<128x1xf32>
      %c0_38 = arith.constant 0 : index
      %c0_39 = arith.constant 0 : index
      %78 = vector.load %arg10[%c0_38, %c0_39] : memref<128x1xf32, #tpu.memory_space<vmem>>, vector<128x1xf32>
      %cst_40 = arith.constant 1.000000e+00 : f32
      %79 = vector.broadcast %cst_40 : f32 to vector<128x1xf32>
      %80 = arith.maximumf %78, %79 : vector<128x1xf32>
      %c0_41 = arith.constant 0 : index
      %c0_42 = arith.constant 0 : index
      %81 = vector.load %arg9[%c0_41, %c0_42] : memref<128x1xf32, #tpu.memory_space<vmem>>, vector<128x1xf32>
      %82 = arith.divf %81, %80 : vector<128x1xf32>
      %83 = arith.subf %82, %77 : vector<128x1xf32>
      %cst_43 = arith.constant -1.000000e+00 : f32
      %84 = vector.broadcast %cst_43 : f32 to vector<128x1xf32>
      %85 = arith.mulf %84, %83 : vector<128x1xf32>
      %86 = arith.mulf %85, %73 : vector<128x1xf32>
      %c0_44 = arith.constant 0 : index
      %c0_45 = arith.constant 0 : index
      %87 = vector.load %arg6[%c0_44, %c0_45] : memref<128x1xf32, #tpu.memory_space<vmem>>, vector<128x1xf32>
      tpu.vector_store %arg6[%c0_44, %c0_45], %86 {strides = array<i32>} : memref<128x1xf32, #tpu.memory_space<vmem>>, vector<128x1xf32>,
    } else {
    }
    return
  }
  func.func @transform_0(%arg0: i32, %arg1: i32) -> (i32, i32) {
    %c0_i32 = arith.constant 0 : i32
    %c0_i32_0 = arith.constant 0 : i32
    return %arg0, %c0_i32 : i32, i32
  }
  func.func @transform_1(%arg0: i32, %arg1: i32) -> (i32, i32) {
    %c0_i32 = arith.constant 0 : i32
    %c0_i32_0 = arith.constant 0 : i32
    return %c0_i32, %arg1 : i32, i32
  }
  func.func @transform_2(%arg0: i32, %arg1: i32) -> (i32, i32) {
    %c0_i32 = arith.constant 0 : i32
    %c0_i32_0 = arith.constant 0 : i32
    return %arg0, %c0_i32 : i32, i32
  }
  func.func @transform_3(%arg0: i32, %arg1: i32) -> (i32, i32) {
    %c0_i32 = arith.constant 0 : i32
    %c0_i32_0 = arith.constant 0 : i32
    return %arg1, %c0_i32 : i32, i32
  }
  func.func @transform_4(%arg0: i32, %arg1: i32) -> (i32, i32) {
    %c0_i32 = arith.constant 0 : i32
    %c0_i32_0 = arith.constant 0 : i32
    return %arg0, %c0_i32 : i32, i32
  }
}

</mosaic_0001>

<llo_original>
// kernel: tpu_custom_call.1
$region0: #{tpu_custom_call.1}
  #allocation0 [shape = 'u32[]', space=smem, size = 0x4, offset = 0x4, fixed_abs, tag = 'smem constant byte address 0x4 - core index']
  #allocation1 [shape = 'u32[144,128]{1,0:T(1,128)}', space=vmem, size = 0x12000, scoped, tag = 'internal scratch']
  #allocation2 [shape = 'f32[128,1]{1,0:T(8,128)}', space=vmem, size = 0x10000, scoped, tag = 'scratch operand']
  #allocation3 [shape = 'f32[128,1]{1,0:T(8,128)}', space=vmem, size = 0x10000, scoped, tag = 'scratch operand']
  #allocation4 [shape = 'f32[128,1]{1,0:T(8,128)}', space=vmem, size = 0x10000, scoped, tag = 'scratch operand']
  #allocation5 [shape = 'f32[128,1]{1,0:T(8,128)}', space=vmem, size = 0x10000, scoped, tag = 'scratch operand']
  %s0 = inlined_call_operand.vmem [shape: s32[128,1], index: 0, kind: input, shape index: {}]
  %s1 = inlined_call_operand.vmem [shape: s32[1,128], index: 1, kind: input, shape index: {}]
  %s2 = inlined_call_operand.vmem [shape: f32[128,128], index: 2, kind: input, shape index: {}]
  %s3 = inlined_call_operand.hbm [shape: f32[128,128], index: 3, kind: input, shape index: {}]
  %s4 = inlined_call_operand.vmem [shape: f32[128,1], index: 4, kind: output, shape index: {}]
  %s5 = sld [smem:[#allocation0]]
  $region38: #{tpu_custom_call.1} parent=0
    _
  %s7 = ssub.s32 1, %s5
  %s8 = scalar_select 0, %s7, %s5
  $region1: #{tpu_custom_call.1} parent=0
    #allocation6 [shape = 'u8[65536]{0}', space=vmem, size = 0x10000, scoped, tag = 'input window, operand 3, single buffered']
    #allocation7 [shape = 's32[1]{0}', space=sflag, size = 0x4, scoped, tag = 'scoped memory for tpu_custom_call.1']
    %9 = vsyncpa [#allocation7], 0
    // Predicated region
    $region2: #{tpu_custom_call.1} parent=1 // pred_check
      _
    $region3: #{tpu_custom_call.1} parent=1 // pred_check_branch
      %11 = sbr.rel (0) target = $region5
    $region4: #{tpu_custom_call.1} parent=1 // pred_region
      _
    $region5: #{tpu_custom_call.1} parent=1 // pred_fallthru
      _
    // Predicated region
    $region6: #{tpu_custom_call.1} parent=1 // pred_check
      _
    $region7: #{tpu_custom_call.1} parent=1 // pred_check_branch
      %13 = sbr.rel (0) target = $region9
    $region8: #{tpu_custom_call.1} parent=1 // pred_region
      _
    $region9: #{tpu_custom_call.1} parent=1 // pred_fallthru
      _
    // Predicated region
    $region10: #{tpu_custom_call.1} parent=1 // pred_check
      _
    $region11: #{tpu_custom_call.1} parent=1 // pred_check_branch
      %15 = sbr.rel (0) target = $region13
    $region12: #{tpu_custom_call.1} parent=1 // pred_region
      _
    $region13: #{tpu_custom_call.1} parent=1 // pred_fallthru
      _
    // Predicated region
    $region14: #{tpu_custom_call.1} parent=1 // pred_check
      _
    $region15: #{tpu_custom_call.1} parent=1 // pred_check_branch
      %17 = sbr.rel (0) target = $region17
    $region16: #{tpu_custom_call.1} parent=1 // pred_region
      %s19 = ssub.s32 2048, 2048
      %20 = vsyncadd [#allocation7], %s19
      %s21 = sshll.u32 [#allocation6], 4
      %s22 = int_to_ptr.vmem [resolvable:$true] %s21
      %27 = dma.hbm_to_vmem [thread:$0]  %s3, 2048, %s22, [#allocation7], 128, 128, 8
    $region17: #{tpu_custom_call.1} parent=1 // pred_fallthru
      _
    // Predicated region
    $region18: #{tpu_custom_call.1} parent=1 // pred_check
      _
    $region19: #{tpu_custom_call.1} parent=1 // pred_check_branch
      %29 = sbr.rel (0) target = $region21
    $region20: #{tpu_custom_call.1} parent=1 // pred_region
      %30 = dma.done [#allocation7], 2048
    $region21: #{tpu_custom_call.1} parent=1 // pred_fallthru
      _
    %p31 = scmp.eq.s32.totalorder 0, 0
    // Predicated region
    $region22: #{tpu_custom_call.1} parent=1 // pred_check
      %p32 = pneg %p31
    $region23: #{tpu_custom_call.1} parent=1 // pred_check_branch
      %34 = sbr.rel (%p32) target = $region25
    $region24: #{tpu_custom_call.1} parent=1 // pred_region
      %vm35 = vcmask 7168
      %36 = vst.msk [vmem:[#allocation2] sm:$0xff] %vm35, -1e+30
      %37 = vst.msk [vmem:[#allocation2 + $0x8] sm:$0xff] %vm35, -1e+30
      %38 = vst.msk [vmem:[#allocation2 + $0x10] sm:$0xff] %vm35, -1e+30
      %39 = vst.msk [vmem:[#allocation2 + $0x18] sm:$0xff] %vm35, -1e+30
      %40 = vst.msk [vmem:[#allocation2 + $0x20] sm:$0xff] %vm35, -1e+30
      %41 = vst.msk [vmem:[#allocation2 + $0x28] sm:$0xff] %vm35, -1e+30
      %42 = vst.msk [vmem:[#allocation2 + $0x30] sm:$0xff] %vm35, -1e+30
      %43 = vst.msk [vmem:[#allocation2 + $0x38] sm:$0xff] %vm35, -1e+30
      %44 = vst.msk [vmem:[#allocation2 + $0x40] sm:$0xff] %vm35, -1e+30
      %45 = vst.msk [vmem:[#allocation2 + $0x48] sm:$0xff] %vm35, -1e+30
      %46 = vst.msk [vmem:[#allocation2 + $0x50] sm:$0xff] %vm35, -1e+30
      %47 = vst.msk [vmem:[#allocation2 + $0x58] sm:$0xff] %vm35, -1e+30
      %48 = vst.msk [vmem:[#allocation2 + $0x60] sm:$0xff] %vm35, -1e+30
      %49 = vst.msk [vmem:[#allocation2 + $0x68] sm:$0xff] %vm35, -1e+30
      %50 = vst.msk [vmem:[#allocation2 + $0x70] sm:$0xff] %vm35, -1e+30
      %51 = vst.msk [vmem:[#allocation2 + $0x78] sm:$0xff] %vm35, -1e+30
      %52 = vst.msk [vmem:[#allocation3] sm:$0xff] %vm35, 0.0
      %53 = vst.msk [vmem:[#allocation3 + $0x8] sm:$0xff] %vm35, 0.0
      %54 = vst.msk [vmem:[#allocation3 + $0x10] sm:$0xff] %vm35, 0.0
      %55 = vst.msk [vmem:[#allocation3 + $0x18] sm:$0xff] %vm35, 0.0
      %56 = vst.msk [vmem:[#allocation3 + $0x20] sm:$0xff] %vm35, 0.0
      %57 = vst.msk [vmem:[#allocation3 + $0x28] sm:$0xff] %vm35, 0.0
      %58 = vst.msk [vmem:[#allocation3 + $0x30] sm:$0xff] %vm35, 0.0
      %59 = vst.msk [vmem:[#allocation3 + $0x38] sm:$0xff] %vm35, 0.0
      %60 = vst.msk [vmem:[#allocation3 + $0x40] sm:$0xff] %vm35, 0.0
      %61 = vst.msk [vmem:[#allocation3 + $0x48] sm:$0xff] %vm35, 0.0
      %62 = vst.msk [vmem:[#allocation3 + $0x50] sm:$0xff] %vm35, 0.0
      %63 = vst.msk [vmem:[#allocation3 + $0x58] sm:$0xff] %vm35, 0.0
      %64 = vst.msk [vmem:[#allocation3 + $0x60] sm:$0xff] %vm35, 0.0
      %65 = vst.msk [vmem:[#allocation3 + $0x68] sm:$0xff] %vm35, 0.0
      %66 = vst.msk [vmem:[#allocation3 + $0x70] sm:$0xff] %vm35, 0.0
      %67 = vst.msk [vmem:[#allocation3 + $0x78] sm:$0xff] %vm35, 0.0
      %68 = vst.msk [vmem:[#allocation4] sm:$0xff] %vm35, 0.0
      %69 = vst.msk [vmem:[#allocation4 + $0x8] sm:$0xff] %vm35, 0.0
      %70 = vst.msk [vmem:[#allocation4 + $0x10] sm:$0xff] %vm35, 0.0
      %71 = vst.msk [vmem:[#allocation4 + $0x18] sm:$0xff] %vm35, 0.0
      %72 = vst.msk [vmem:[#allocation4 + $0x20] sm:$0xff] %vm35, 0.0
      %73 = vst.msk [vmem:[#allocation4 + $0x28] sm:$0xff] %vm35, 0.0
      %74 = vst.msk [vmem:[#allocation4 + $0x30] sm:$0xff] %vm35, 0.0
      %75 = vst.msk [vmem:[#allocation4 + $0x38] sm:$0xff] %vm35, 0.0
      %76 = vst.msk [vmem:[#allocation4 + $0x40] sm:$0xff] %vm35, 0.0
      %77 = vst.msk [vmem:[#allocation4 + $0x48] sm:$0xff] %vm35, 0.0
      %78 = vst.msk [vmem:[#allocation4 + $0x50] sm:$0xff] %vm35, 0.0
      %79 = vst.msk [vmem:[#allocation4 + $0x58] sm:$0xff] %vm35, 0.0
      %80 = vst.msk [vmem:[#allocation4 + $0x60] sm:$0xff] %vm35, 0.0
      %81 = vst.msk [vmem:[#allocation4 + $0x68] sm:$0xff] %vm35, 0.0
      %82 = vst.msk [vmem:[#allocation4 + $0x70] sm:$0xff] %vm35, 0.0
      %83 = vst.msk [vmem:[#allocation4 + $0x78] sm:$0xff] %vm35, 0.0
      %84 = vst.msk [vmem:[#allocation5] sm:$0xff] %vm35, 0.0
      %85 = vst.msk [vmem:[#allocation5 + $0x8] sm:$0xff] %vm35, 0.0
      %86 = vst.msk [vmem:[#allocation5 + $0x10] sm:$0xff] %vm35, 0.0
      %87 = vst.msk [vmem:[#allocation5 + $0x18] sm:$0xff] %vm35, 0.0
      %88 = vst.msk [vmem:[#allocation5 + $0x20] sm:$0xff] %vm35, 0.0
      %89 = vst.msk [vmem:[#allocation5 + $0x28] sm:$0xff] %vm35, 0.0
      %90 = vst.msk [vmem:[#allocation5 + $0x30] sm:$0xff] %vm35, 0.0
      %91 = vst.msk [vmem:[#allocation5 + $0x38] sm:$0xff] %vm35, 0.0
      %92 = vst.msk [vmem:[#allocation5 + $0x40] sm:$0xff] %vm35, 0.0
      %93 = vst.msk [vmem:[#allocation5 + $0x48] sm:$0xff] %vm35, 0.0
      %94 = vst.msk [vmem:[#allocation5 + $0x50] sm:$0xff] %vm35, 0.0
      %95 = vst.msk [vmem:[#allocation5 + $0x58] sm:$0xff] %vm35, 0.0
      %96 = vst.msk [vmem:[#allocation5 + $0x60] sm:$0xff] %vm35, 0.0
      %97 = vst.msk [vmem:[#allocation5 + $0x68] sm:$0xff] %vm35, 0.0
      %98 = vst.msk [vmem:[#allocation5 + $0x70] sm:$0xff] %vm35, 0.0
      %99 = vst.msk [vmem:[#allocation5 + $0x78] sm:$0xff] %vm35, 0.0
    $region25: #{tpu_custom_call.1} parent=1 // pred_fallthru
      _
    %v100 = vld [vmem:[%s2] sm:$0xff]
    %v101 = vld [vmem:[%s2 + $0x8] sm:$0xff]
    %v102 = vld [vmem:[%s2 + $0x10] sm:$0xff]
    %v103 = vld [vmem:[%s2 + $0x18] sm:$0xff]
    %v104 = vld [vmem:[%s2 + $0x20] sm:$0xff]
    %v105 = vld [vmem:[%s2 + $0x28] sm:$0xff]
    %v106 = vld [vmem:[%s2 + $0x30] sm:$0xff]
    %v107 = vld [vmem:[%s2 + $0x38] sm:$0xff]
    %v108 = vld [vmem:[%s2 + $0x40] sm:$0xff]
    %v109 = vld [vmem:[%s2 + $0x48] sm:$0xff]
    %v110 = vld [vmem:[%s2 + $0x50] sm:$0xff]
    %v111 = vld [vmem:[%s2 + $0x58] sm:$0xff]
    %v112 = vld [vmem:[%s2 + $0x60] sm:$0xff]
    %v113 = vld [vmem:[%s2 + $0x68] sm:$0xff]
    %v114 = vld [vmem:[%s2 + $0x70] sm:$0xff]
    %v115 = vld [vmem:[%s2 + $0x78] sm:$0xff]
    %v116 = vld [vmem:[#allocation6] sm:$0xff]
    %v117 = vld [vmem:[#allocation6 + $0x8] sm:$0xff]
    %v118 = vld [vmem:[#allocation6 + $0x10] sm:$0xff]
    %v119 = vld [vmem:[#allocation6 + $0x18] sm:$0xff]
    %v120 = vld [vmem:[#allocation6 + $0x20] sm:$0xff]
    %v121 = vld [vmem:[#allocation6 + $0x28] sm:$0xff]
    %v122 = vld [vmem:[#allocation6 + $0x30] sm:$0xff]
    %v123 = vld [vmem:[#allocation6 + $0x38] sm:$0xff]
    %v124 = vld [vmem:[#allocation6 + $0x40] sm:$0xff]
    %v125 = vld [vmem:[#allocation6 + $0x48] sm:$0xff]
    %v126 = vld [vmem:[#allocation6 + $0x50] sm:$0xff]
    %v127 = vld [vmem:[#allocation6 + $0x58] sm:$0xff]
    %v128 = vld [vmem:[#allocation6 + $0x60] sm:$0xff]
    %v129 = vld [vmem:[#allocation6 + $0x68] sm:$0xff]
    %v130 = vld [vmem:[#allocation6 + $0x70] sm:$0xff]
    %v131 = vld [vmem:[#allocation6 + $0x78] sm:$0xff]
    %132 = vmatprep.subr.mxu0 0.0
    %133 = vmatpush1.xpose.msra.mxu0 %v116
    %134 = vmatprep.subr.mxu0 0.0
    %135 = vmatpush1.xpose.msra.mxu0 %v117
    %136 = vmatprep.subr.mxu0 0.0
    %137 = vmatpush1.xpose.msra.mxu0 %v118
    %138 = vmatprep.subr.mxu0 0.0
    %139 = vmatpush1.xpose.msra.mxu0 %v119
    %140 = vmatprep.subr.mxu0 0.0
    %141 = vmatpush1.xpose.msra.mxu0 %v120
    %142 = vmatprep.subr.mxu0 0.0
    %143 = vmatpush1.xpose.msra.mxu0 %v121
    %144 = vmatprep.subr.mxu0 0.0
    %145 = vmatpush1.xpose.msra.mxu0 %v122
    %146 = vmatprep.subr.mxu0 0.0
    %147 = vmatpush1.xpose.msra.mxu0 %v123
    %148 = vmatprep.subr.mxu0 0.0
    %149 = vmatpush1.xpose.msra.mxu0 %v124
    %150 = vmatprep.subr.mxu0 0.0
    %151 = vmatpush1.xpose.msra.mxu0 %v125
    %152 = vmatprep.subr.mxu0 0.0
    %153 = vmatpush1.xpose.msra.mxu0 %v126
    %154 = vmatprep.subr.mxu0 0.0
    %155 = vmatpush1.xpose.msra.mxu0 %v127
    %156 = vmatprep.subr.mxu0 0.0
    %157 = vmatpush1.xpose.msra.mxu0 %v128
    %158 = vmatprep.subr.mxu0 0.0
    %159 = vmatpush1.xpose.msra.mxu0 %v129
    %160 = vmatprep.subr.mxu0 0.0
    %161 = vmatpush1.xpose.msra.mxu0 %v130
    %162 = vmatprep.subr.mxu0 0.0
    %163 = vmatpush1.xpose.msra.mxu0 %v131
    %164 = vmatprep.subr.mxu0 0.0
    %165 = vmatpush1.xpose.msra.mxu0 0.0
    %166 = vmatprep.subr.mxu0 0.0
    %167 = vmatpush1.xpose.msra.mxu0 0.0
    %168 = vmatprep.subr.mxu0 0.0
    %169 = vmatpush1.xpose.msra.mxu0 0.0
    %170 = vmatprep.subr.mxu0 0.0
    %171 = vmatpush1.xpose.msra.mxu0 0.0
    %172 = vmatprep.subr.mxu0 0.0
    %173 = vmatpush1.xpose.msra.mxu0 0.0
    %174 = vmatprep.subr.mxu0 0.0
    %175 = vmatpush1.xpose.msra.mxu0 0.0
    %176 = vmatprep.subr.mxu0 0.0
    %177 = vmatpush1.xpose.msra.mxu0 0.0
    %178 = vmatprep.subr.mxu0 0.0
    %179 = vmatpush1.xpose.msra.mxu0 0.0
    %180 = vmatprep.subr.mxu0 0.0
    %181 = vmatpush1.xpose.msra.mxu0 0.0
    %182 = vmatprep.subr.mxu0 0.0
    %183 = vmatpush1.xpose.msra.mxu0 0.0
    %184 = vmatprep.subr.mxu0 0.0
    %185 = vmatpush1.xpose.msra.mxu0 0.0
    %186 = vmatprep.subr.mxu0 0.0
    %187 = vmatpush1.xpose.msra.mxu0 0.0
    %188 = vmatprep.subr.mxu0 0.0
    %189 = vmatpush1.xpose.msra.mxu0 0.0
    %190 = vmatprep.subr.mxu0 0.0
    %191 = vmatpush1.xpose.msra.mxu0 0.0
    %192 = vmatprep.subr.mxu0 0.0
    %193 = vmatpush1.xpose.msra.mxu0 0.0
    %194 = vmatprep.subr.mxu0 0.0
    %195 = vmatpush1.xpose.msra.mxu0 0.0
    %196 = vmatprep.mubr.f32.mxu0 0.0
    %197 = vmatmul.mubr.f32.gmra.mrb[0].mxu0 %v100
    %v198 = vpop.f32.mrb[0].mxu0
    %v199 = vadd.f32 0.0, %v198
    %v200 = vpop.f32.mrb[0].mxu0
    %201 = vmatprep.mubr.f32.mxu0 0.0
    %202 = vmatmul.mubr.f32.gmra.mrb[0].mxu0 %v101
    %v203 = vpop.f32.mrb[0].mxu0
    %v204 = vadd.f32 0.0, %v203
    %v205 = vpop.f32.mrb[0].mxu0
    %206 = vmatprep.mubr.f32.mxu0 0.0
    %207 = vmatmul.mubr.f32.gmra.mrb[0].mxu0 %v102
    %v208 = vpop.f32.mrb[0].mxu0
    %v209 = vadd.f32 0.0, %v208
    %v210 = vpop.f32.mrb[0].mxu0
    %211 = vmatprep.mubr.f32.mxu0 0.0
    %212 = vmatmul.mubr.f32.gmra.mrb[0].mxu0 %v103
    %v213 = vpop.f32.mrb[0].mxu0
    %v214 = vadd.f32 0.0, %v213
    %v215 = vpop.f32.mrb[0].mxu0
    %216 = vmatprep.mubr.f32.mxu0 0.0
    %217 = vmatmul.mubr.f32.gmra.mrb[0].mxu0 %v104
    %v218 = vpop.f32.mrb[0].mxu0
    %v219 = vadd.f32 0.0, %v218
    %v220 = vpop.f32.mrb[0].mxu0
    %221 = vmatprep.mubr.f32.mxu0 0.0
    %222 = vmatmul.mubr.f32.gmra.mrb[0].mxu0 %v105
    %v223 = vpop.f32.mrb[0].mxu0
    %v224 = vadd.f32 0.0, %v223
    %v225 = vpop.f32.mrb[0].mxu0
    %226 = vmatprep.mubr.f32.mxu0 0.0
    %227 = vmatmul.mubr.f32.gmra.mrb[0].mxu0 %v106
    %v228 = vpop.f32.mrb[0].mxu0
    %v229 = vadd.f32 0.0, %v228
    %v230 = vpop.f32.mrb[0].mxu0
    %231 = vmatprep.mubr.f32.mxu0 0.0
    %232 = vmatmul.mubr.f32.gmra.mrb[0].mxu0 %v107
    %v233 = vpop.f32.mrb[0].mxu0
    %v234 = vadd.f32 0.0, %v233
    %v235 = vpop.f32.mrb[0].mxu0
    %236 = vmatprep.mubr.f32.mxu0 0.0
    %237 = vmatmul.mubr.f32.gmra.mrb[0].mxu0 %v108
    %v238 = vpop.f32.mrb[0].mxu0
    %v239 = vadd.f32 0.0, %v238
    %v240 = vpop.f32.mrb[0].mxu0
    %241 = vmatprep.mubr.f32.mxu0 0.0
    %242 = vmatmul.mubr.f32.gmra.mrb[0].mxu0 %v109
    %v243 = vpop.f32.mrb[0].mxu0
    %v244 = vadd.f32 0.0, %v243
    %v245 = vpop.f32.mrb[0].mxu0
    %246 = vmatprep.mubr.f32.mxu0 0.0
    %247 = vmatmul.mubr.f32.gmra.mrb[0].mxu0 %v110
    %v248 = vpop.f32.mrb[0].mxu0
    %v249 = vadd.f32 0.0, %v248
    %v250 = vpop.f32.mrb[0].mxu0
    %251 = vmatprep.mubr.f32.mxu0 0.0
    %252 = vmatmul.mubr.f32.gmra.mrb[0].mxu0 %v111
    %v253 = vpop.f32.mrb[0].mxu0
    %v254 = vadd.f32 0.0, %v253
    %v255 = vpop.f32.mrb[0].mxu0
    %256 = vmatprep.mubr.f32.mxu0 0.0
    %257 = vmatmul.mubr.f32.gmra.mrb[0].mxu0 %v112
    %v258 = vpop.f32.mrb[0].mxu0
    %v259 = vadd.f32 0.0, %v258
    %v260 = vpop.f32.mrb[0].mxu0
    %261 = vmatprep.mubr.f32.mxu0 0.0
    %262 = vmatmul.mubr.f32.gmra.mrb[0].mxu0 %v113
    %v263 = vpop.f32.mrb[0].mxu0
    %v264 = vadd.f32 0.0, %v263
    %v265 = vpop.f32.mrb[0].mxu0
    %266 = vmatprep.mubr.f32.mxu0 0.0
    %267 = vmatmul.mubr.f32.gmra.mrb[0].mxu0 %v114
    %v268 = vpop.f32.mrb[0].mxu0
    %v269 = vadd.f32 0.0, %v268
    %v270 = vpop.f32.mrb[0].mxu0
    %271 = vmatprep.mubr.f32.mxu0 0.0
    %272 = vmatmul.mubr.f32.gmra.mrb[0].mxu0 %v115
    %v273 = vpop.f32.mrb[0].mxu0
    %v274 = vadd.f32 0.0, %v273
    %v275 = vpop.f32.mrb[0].mxu0
    %276 = vdwg.mxu0
    %v277 = vlaneseq
    %v278 = vshrl.u32 %v277, 7
    %v279 = vadd.s32 %v278, 8
    %v280 = vadd.s32 %v278, 16
    %v281 = vadd.s32 %v278, 24
    %v282 = vadd.s32 %v278, 32
    %v283 = vadd.s32 %v278, 40
    %v284 = vadd.s32 %v278, 48
    %v285 = vadd.s32 %v278, 56
    %v286 = vadd.s32 %v278, 64
    %v287 = vadd.s32 %v278, 72
    %v288 = vadd.s32 %v278, 80
    %v289 = vadd.s32 %v278, 88
    %v290 = vadd.s32 %v278, 96
    %v291 = vadd.s32 %v278, 104
    %v292 = vadd.s32 %v278, 112
    %v293 = vadd.s32 %v278, 120
    %s294 = smul.u32 0, 128
    %v295 = vstv %s294
    %v296 = vadd.s32 %v278, %v295
    %v297 = vadd.s32 %v279, %v295
    %v298 = vadd.s32 %v280, %v295
    %v299 = vadd.s32 %v281, %v295
    %v300 = vadd.s32 %v282, %v295
    %v301 = vadd.s32 %v283, %v295
    %v302 = vadd.s32 %v284, %v295
    %v303 = vadd.s32 %v285, %v295
    %v304 = vadd.s32 %v286, %v295
    %v305 = vadd.s32 %v287, %v295
    %v306 = vadd.s32 %v288, %v295
    %v307 = vadd.s32 %v289, %v295
    %v308 = vadd.s32 %v290, %v295
    %v309 = vadd.s32 %v291, %v295
    %v310 = vadd.s32 %v292, %v295
    %v311 = vadd.s32 %v293, %v295
    %v312 = vlaneseq
    %v313 = vand.u32 %v312, 127
    %s314 = smul.u32 0, 128
    %v315 = vstv %s314
    %v316 = vadd.s32 %v313, %v315
    %vm317 = vcmp.lt.s32.totalorder %v316, 16
    %v318 = vsel %vm317, 1, 0
    %v319 = vcvt.s32.f32 %v318
    %v320 = vsub.f32 %v319, 1.0
    %v321 = vmul.f32 %v320, 1e+30
    %vm322 = vcmp.ne.s32.totalorder %v296, %v316
    %vm323 = vcmp.ne.s32.totalorder %v297, %v316
    %vm324 = vcmp.ne.s32.totalorder %v298, %v316
    %vm325 = vcmp.ne.s32.totalorder %v299, %v316
    %vm326 = vcmp.ne.s32.totalorder %v300, %v316
    %vm327 = vcmp.ne.s32.totalorder %v301, %v316
    %vm328 = vcmp.ne.s32.totalorder %v302, %v316
    %vm329 = vcmp.ne.s32.totalorder %v303, %v316
    %vm330 = vcmp.ne.s32.totalorder %v304, %v316
    %vm331 = vcmp.ne.s32.totalorder %v305, %v316
    %vm332 = vcmp.ne.s32.totalorder %v306, %v316
    %vm333 = vcmp.ne.s32.totalorder %v307, %v316
    %vm334 = vcmp.ne.s32.totalorder %v308, %v316
    %vm335 = vcmp.ne.s32.totalorder %v309, %v316
    %vm336 = vcmp.ne.s32.totalorder %v310, %v316
    %vm337 = vcmp.ne.s32.totalorder %v311, %v316
    %v338 = vsel %vm322, 1, 0
    %v339 = vsel %vm323, 1, 0
    %v340 = vsel %vm324, 1, 0
    %v341 = vsel %vm325, 1, 0
    %v342 = vsel %vm326, 1, 0
    %v343 = vsel %vm327, 1, 0
    %v344 = vsel %vm328, 1, 0
    %v345 = vsel %vm329, 1, 0
    %v346 = vsel %vm330, 1, 0
    %v347 = vsel %vm331, 1, 0
    %v348 = vsel %vm332, 1, 0
    %v349 = vsel %vm333, 1, 0
    %v350 = vsel %vm334, 1, 0
    %v351 = vsel %vm335, 1, 0
    %v352 = vsel %vm336, 1, 0
    %v353 = vsel %vm337, 1, 0
    %v354 = vcvt.s32.f32 %v338
    %v355 = vcvt.s32.f32 %v339
    %v356 = vcvt.s32.f32 %v340
    %v357 = vcvt.s32.f32 %v341
    %v358 = vcvt.s32.f32 %v342
    %v359 = vcvt.s32.f32 %v343
    %v360 = vcvt.s32.f32 %v344
    %v361 = vcvt.s32.f32 %v345
    %v362 = vcvt.s32.f32 %v346
    %v363 = vcvt.s32.f32 %v347
    %v364 = vcvt.s32.f32 %v348
    %v365 = vcvt.s32.f32 %v349
    %v366 = vcvt.s32.f32 %v350
    %v367 = vcvt.s32.f32 %v351
    %v368 = vcvt.s32.f32 %v352
    %v369 = vcvt.s32.f32 %v353
    %v370 = vmul.f32 %v354, %v319
    %v371 = vmul.f32 %v355, %v319
    %v372 = vmul.f32 %v356, %v319
    %v373 = vmul.f32 %v357, %v319
    %v374 = vmul.f32 %v358, %v319
    %v375 = vmul.f32 %v359, %v319
    %v376 = vmul.f32 %v360, %v319
    %v377 = vmul.f32 %v361, %v319
    %v378 = vmul.f32 %v362, %v319
    %v379 = vmul.f32 %v363, %v319
    %v380 = vmul.f32 %v364, %v319
    %v381 = vmul.f32 %v365, %v319
    %v382 = vmul.f32 %v366, %v319
    %v383 = vmul.f32 %v367, %v319
    %v384 = vmul.f32 %v368, %v319
    %v385 = vmul.f32 %v369, %v319
    %v386 = vld [vmem:[%s0] sm:$0xff]
    %v387 = vld [vmem:[%s0 + $0x8] sm:$0xff]
    %v388 = vld [vmem:[%s0 + $0x10] sm:$0xff]
    %v389 = vld [vmem:[%s0 + $0x18] sm:$0xff]
    %v390 = vld [vmem:[%s0 + $0x20] sm:$0xff]
    %v391 = vld [vmem:[%s0 + $0x28] sm:$0xff]
    %v392 = vld [vmem:[%s0 + $0x30] sm:$0xff]
    %v393 = vld [vmem:[%s0 + $0x38] sm:$0xff]
    %v394 = vld [vmem:[%s0 + $0x40] sm:$0xff]
    %v395 = vld [vmem:[%s0 + $0x48] sm:$0xff]
    %v396 = vld [vmem:[%s0 + $0x50] sm:$0xff]
    %v397 = vld [vmem:[%s0 + $0x58] sm:$0xff]
    %v398 = vld [vmem:[%s0 + $0x60] sm:$0xff]
    %v399 = vld [vmem:[%s0 + $0x68] sm:$0xff]
    %v400 = vld [vmem:[%s0 + $0x70] sm:$0xff]
    %v401 = vld [vmem:[%s0 + $0x78] sm:$0xff]
    %v402 = vld [vmem:[%s1] sm:$0x1]
    %403 = vset.pattern.permute.xlu0 0
    %404 = vperm.xlu0 %403, %v386
    %v405 = vpop.permute.xlu0 %404
    %406 = vset.pattern.permute.xlu0 0
    %407 = vperm.xlu0 %406, %v387
    %v408 = vpop.permute.xlu0 %407
    %409 = vset.pattern.permute.xlu0 0
    %410 = vperm.xlu0 %409, %v388
    %v411 = vpop.permute.xlu0 %410
    %412 = vset.pattern.permute.xlu0 0
    %413 = vperm.xlu0 %412, %v389
    %v414 = vpop.permute.xlu0 %413
    %415 = vset.pattern.permute.xlu0 0
    %416 = vperm.xlu0 %415, %v390
    %v417 = vpop.permute.xlu0 %416
    %418 = vset.pattern.permute.xlu0 0
    %419 = vperm.xlu0 %418, %v391
    %v420 = vpop.permute.xlu0 %419
    %421 = vset.pattern.permute.xlu0 0
    %422 = vperm.xlu0 %421, %v392
    %v423 = vpop.permute.xlu0 %422
    %424 = vset.pattern.permute.xlu0 0
    %425 = vperm.xlu0 %424, %v393
    %v426 = vpop.permute.xlu0 %425
    %427 = vset.pattern.permute.xlu0 0
    %428 = vperm.xlu0 %427, %v394
    %v429 = vpop.permute.xlu0 %428
    %430 = vset.pattern.permute.xlu0 0
    %431 = vperm.xlu0 %430, %v395
    %v432 = vpop.permute.xlu0 %431
    %433 = vset.pattern.permute.xlu0 0
    %434 = vperm.xlu0 %433, %v396
    %v435 = vpop.permute.xlu0 %434
    %436 = vset.pattern.permute.xlu0 0
    %437 = vperm.xlu0 %436, %v397
    %v438 = vpop.permute.xlu0 %437
    %439 = vset.pattern.permute.xlu0 0
    %440 = vperm.xlu0 %439, %v398
    %v441 = vpop.permute.xlu0 %440
    %442 = vset.pattern.permute.xlu0 0
    %443 = vperm.xlu0 %442, %v399
    %v444 = vpop.permute.xlu0 %443
    %445 = vset.pattern.permute.xlu0 0
    %446 = vperm.xlu0 %445, %v400
    %v447 = vpop.permute.xlu0 %446
    %448 = vset.pattern.permute.xlu0 0
    %449 = vperm.xlu0 %448, %v401
    %v450 = vpop.permute.xlu0 %449
    %v451 = vlaneseq
    %v452 = vshrl.u32 %v451, 7
    %v453 = vsub.s32 0, %v452
    %v454 = vrot.slane %v402, %v453
    %vm455 = vcmp.eq.s32.totalorder %v405, %v454
    %vm456 = vcmp.eq.s32.totalorder %v408, %v454
    %vm457 = vcmp.eq.s32.totalorder %v411, %v454
    %vm458 = vcmp.eq.s32.totalorder %v414, %v454
    %vm459 = vcmp.eq.s32.totalorder %v417, %v454
    %vm460 = vcmp.eq.s32.totalorder %v420, %v454
    %vm461 = vcmp.eq.s32.totalorder %v423, %v454
    %vm462 = vcmp.eq.s32.totalorder %v426, %v454
    %vm463 = vcmp.eq.s32.totalorder %v429, %v454
    %vm464 = vcmp.eq.s32.totalorder %v432, %v454
    %vm465 = vcmp.eq.s32.totalorder %v435, %v454
    %vm466 = vcmp.eq.s32.totalorder %v438, %v454
    %vm467 = vcmp.eq.s32.totalorder %v441, %v454
    %vm468 = vcmp.eq.s32.totalorder %v444, %v454
    %vm469 = vcmp.eq.s32.totalorder %v447, %v454
    %vm470 = vcmp.eq.s32.totalorder %v450, %v454
    %v471 = vsel %vm455, 1, 0
    %v472 = vsel %vm456, 1, 0
    %v473 = vsel %vm457, 1, 0
    %v474 = vsel %vm458, 1, 0
    %v475 = vsel %vm459, 1, 0
    %v476 = vsel %vm460, 1, 0
    %v477 = vsel %vm461, 1, 0
    %v478 = vsel %vm462, 1, 0
    %v479 = vsel %vm463, 1, 0
    %v480 = vsel %vm464, 1, 0
    %v481 = vsel %vm465, 1, 0
    %v482 = vsel %vm466, 1, 0
    %v483 = vsel %vm467, 1, 0
    %v484 = vsel %vm468, 1, 0
    %v485 = vsel %vm469, 1, 0
    %v486 = vsel %vm470, 1, 0
    %v487 = vcvt.s32.f32 %v471
    %v488 = vcvt.s32.f32 %v472
    %v489 = vcvt.s32.f32 %v473
    %v490 = vcvt.s32.f32 %v474
    %v491 = vcvt.s32.f32 %v475
    %v492 = vcvt.s32.f32 %v476
    %v493 = vcvt.s32.f32 %v477
    %v494 = vcvt.s32.f32 %v478
    %v495 = vcvt.s32.f32 %v479
    %v496 = vcvt.s32.f32 %v480
    %v497 = vcvt.s32.f32 %v481
    %v498 = vcvt.s32.f32 %v482
    %v499 = vcvt.s32.f32 %v483
    %v500 = vcvt.s32.f32 %v484
    %v501 = vcvt.s32.f32 %v485
    %v502 = vcvt.s32.f32 %v486
    %v503 = vmul.f32 %v487, %v370
    %v504 = vmul.f32 %v488, %v371
    %v505 = vmul.f32 %v489, %v372
    %v506 = vmul.f32 %v490, %v373
    %v507 = vmul.f32 %v491, %v374
    %v508 = vmul.f32 %v492, %v375
    %v509 = vmul.f32 %v493, %v376
    %v510 = vmul.f32 %v494, %v377
    %v511 = vmul.f32 %v495, %v378
    %v512 = vmul.f32 %v496, %v379
    %v513 = vmul.f32 %v497, %v380
    %v514 = vmul.f32 %v498, %v381
    %v515 = vmul.f32 %v499, %v382
    %v516 = vmul.f32 %v500, %v383
    %v517 = vmul.f32 %v501, %v384
    %v518 = vmul.f32 %v502, %v385
    %v519 = vadd.f32 %v199, %v321
    %v520 = vadd.f32 %v204, %v321
    %v521 = vadd.f32 %v209, %v321
    %v522 = vadd.f32 %v214, %v321
    %v523 = vadd.f32 %v219, %v321
    %v524 = vadd.f32 %v224, %v321
    %v525 = vadd.f32 %v229, %v321
    %v526 = vadd.f32 %v234, %v321
    %v527 = vadd.f32 %v239, %v321
    %v528 = vadd.f32 %v244, %v321
    %v529 = vadd.f32 %v249, %v321
    %v530 = vadd.f32 %v254, %v321
    %v531 = vadd.f32 %v259, %v321
    %v532 = vadd.f32 %v264, %v321
    %v533 = vadd.f32 %v269, %v321
    %v534 = vadd.f32 %v274, %v321
    %v535 = vld [vmem:[#allocation2] sm:$0xff]
    %v536 = vld [vmem:[#allocation2 + $0x8] sm:$0xff]
    %v537 = vld [vmem:[#allocation2 + $0x10] sm:$0xff]
    %v538 = vld [vmem:[#allocation2 + $0x18] sm:$0xff]
    %v539 = vld [vmem:[#allocation2 + $0x20] sm:$0xff]
    %v540 = vld [vmem:[#allocation2 + $0x28] sm:$0xff]
    %v541 = vld [vmem:[#allocation2 + $0x30] sm:$0xff]
    %v542 = vld [vmem:[#allocation2 + $0x38] sm:$0xff]
    %v543 = vld [vmem:[#allocation2 + $0x40] sm:$0xff]
    %v544 = vld [vmem:[#allocation2 + $0x48] sm:$0xff]
    %v545 = vld [vmem:[#allocation2 + $0x50] sm:$0xff]
    %v546 = vld [vmem:[#allocation2 + $0x58] sm:$0xff]
    %v547 = vld [vmem:[#allocation2 + $0x60] sm:$0xff]
    %v548 = vld [vmem:[#allocation2 + $0x68] sm:$0xff]
    %v549 = vld [vmem:[#allocation2 + $0x70] sm:$0xff]
    %v550 = vld [vmem:[#allocation2 + $0x78] sm:$0xff]
    %551 = vmax.xlane.f32.xlu0 %v519
    %v552 = vpop.xlane.xlu0 %551
    %553 = vmax.xlane.f32.xlu0 %v520
    %v554 = vpop.xlane.xlu0 %553
    %555 = vmax.xlane.f32.xlu0 %v521
    %v556 = vpop.xlane.xlu0 %555
    %557 = vmax.xlane.f32.xlu0 %v522
    %v558 = vpop.xlane.xlu0 %557
    %559 = vmax.xlane.f32.xlu0 %v523
    %v560 = vpop.xlane.xlu0 %559
    %561 = vmax.xlane.f32.xlu0 %v524
    %v562 = vpop.xlane.xlu0 %561
    %563 = vmax.xlane.f32.xlu0 %v525
    %v564 = vpop.xlane.xlu0 %563
    %565 = vmax.xlane.f32.xlu0 %v526
    %v566 = vpop.xlane.xlu0 %565
    %567 = vmax.xlane.f32.xlu0 %v527
    %v568 = vpop.xlane.xlu0 %567
    %569 = vmax.xlane.f32.xlu0 %v528
    %v570 = vpop.xlane.xlu0 %569
    %571 = vmax.xlane.f32.xlu0 %v529
    %v572 = vpop.xlane.xlu0 %571
    %573 = vmax.xlane.f32.xlu0 %v530
    %v574 = vpop.xlane.xlu0 %573
    %575 = vmax.xlane.f32.xlu0 %v531
    %v576 = vpop.xlane.xlu0 %575
    %577 = vmax.xlane.f32.xlu0 %v532
    %v578 = vpop.xlane.xlu0 %577
    %579 = vmax.xlane.f32.xlu0 %v533
    %v580 = vpop.xlane.xlu0 %579
    %581 = vmax.xlane.f32.xlu0 %v534
    %v582 = vpop.xlane.xlu0 %581
    %v583 = vmax.f32 %v535, %v552
    %v584 = vmax.f32 %v536, %v554
    %v585 = vmax.f32 %v537, %v556
    %v586 = vmax.f32 %v538, %v558
    %v587 = vmax.f32 %v539, %v560
    %v588 = vmax.f32 %v540, %v562
    %v589 = vmax.f32 %v541, %v564
    %v590 = vmax.f32 %v542, %v566
    %v591 = vmax.f32 %v543, %v568
    %v592 = vmax.f32 %v544, %v570
    %v593 = vmax.f32 %v545, %v572
    %v594 = vmax.f32 %v546, %v574
    %v595 = vmax.f32 %v547, %v576
    %v596 = vmax.f32 %v548, %v578
    %v597 = vmax.f32 %v549, %v580
    %v598 = vmax.f32 %v550, %v582
    %v599 = vsub.f32 %v535, %v583
    %v600 = vsub.f32 %v536, %v584
    %v601 = vsub.f32 %v537, %v585
    %v602 = vsub.f32 %v538, %v586
    %v603 = vsub.f32 %v539, %v587
    %v604 = vsub.f32 %v540, %v588
    %v605 = vsub.f32 %v541, %v589
    %v606 = vsub.f32 %v542, %v590
    %v607 = vsub.f32 %v543, %v591
    %v608 = vsub.f32 %v544, %v592
    %v609 = vsub.f32 %v545, %v593
    %v610 = vsub.f32 %v546, %v594
    %v611 = vsub.f32 %v547, %v595
    %v612 = vsub.f32 %v548, %v596
    %v613 = vsub.f32 %v549, %v597
    %v614 = vsub.f32 %v550, %v598
    %v615 = vmul.f32 %v599, 1.442695
    %v616 = vpow.pop %v615
    %v617 = vmul.f32 %v600, 1.442695
    %v618 = vpow.pop %v617
    %v619 = vmul.f32 %v601, 1.442695
    %v620 = vpow.pop %v619
    %v621 = vmul.f32 %v602, 1.442695
    %v622 = vpow.pop %v621
    %v623 = vmul.f32 %v603, 1.442695
    %v624 = vpow.pop %v623
    %v625 = vmul.f32 %v604, 1.442695
    %v626 = vpow.pop %v625
    %v627 = vmul.f32 %v605, 1.442695
    %v628 = vpow.pop %v627
    %v629 = vmul.f32 %v606, 1.442695
    %v630 = vpow.pop %v629
    %v631 = vmul.f32 %v607, 1.442695
    %v632 = vpow.pop %v631
    %v633 = vmul.f32 %v608, 1.442695
    %v634 = vpow.pop %v633
    %v635 = vmul.f32 %v609, 1.442695
    %v636 = vpow.pop %v635
    %v637 = vmul.f32 %v610, 1.442695
    %v638 = vpow.pop %v637
    %v639 = vmul.f32 %v611, 1.442695
    %v640 = vpow.pop %v639
    %v641 = vmul.f32 %v612, 1.442695
    %v642 = vpow.pop %v641
    %v643 = vmul.f32 %v613, 1.442695
    %v644 = vpow.pop %v643
    %v645 = vmul.f32 %v614, 1.442695
    %v646 = vpow.pop %v645
    %648 = vset.pattern.permute.xlu0 0
    %649 = vperm.xlu0 %648, %v583
    %v650 = vpop.permute.xlu0 %649
    %653 = vset.pattern.permute.xlu0 0
    %654 = vperm.xlu0 %653, %v584
    %v655 = vpop.permute.xlu0 %654
    %658 = vset.pattern.permute.xlu0 0
    %659 = vperm.xlu0 %658, %v585
    %v660 = vpop.permute.xlu0 %659
    %663 = vset.pattern.permute.xlu0 0
    %664 = vperm.xlu0 %663, %v586
    %v665 = vpop.permute.xlu0 %664
    %668 = vset.pattern.permute.xlu0 0
    %669 = vperm.xlu0 %668, %v587
    %v670 = vpop.permute.xlu0 %669
    %673 = vset.pattern.permute.xlu0 0
    %674 = vperm.xlu0 %673, %v588
    %v675 = vpop.permute.xlu0 %674
    %678 = vset.pattern.permute.xlu0 0
    %679 = vperm.xlu0 %678, %v589
    %v680 = vpop.permute.xlu0 %679
    %683 = vset.pattern.permute.xlu0 0
    %684 = vperm.xlu0 %683, %v590
    %v685 = vpop.permute.xlu0 %684
    %688 = vset.pattern.permute.xlu0 0
    %689 = vperm.xlu0 %688, %v591
    %v690 = vpop.permute.xlu0 %689
    %693 = vset.pattern.permute.xlu0 0
    %694 = vperm.xlu0 %693, %v592
    %v695 = vpop.permute.xlu0 %694
    %698 = vset.pattern.permute.xlu0 0
    %699 = vperm.xlu0 %698, %v593
    %v700 = vpop.permute.xlu0 %699
    %703 = vset.pattern.permute.xlu0 0
    %704 = vperm.xlu0 %703, %v594
    %v705 = vpop.permute.xlu0 %704
    %708 = vset.pattern.permute.xlu0 0
    %709 = vperm.xlu0 %708, %v595
    %v710 = vpop.permute.xlu0 %709
    %713 = vset.pattern.permute.xlu0 0
    %714 = vperm.xlu0 %713, %v596
    %v715 = vpop.permute.xlu0 %714
    %718 = vset.pattern.permute.xlu0 0
    %719 = vperm.xlu0 %718, %v597
    %v720 = vpop.permute.xlu0 %719
    %723 = vset.pattern.permute.xlu0 0
    %724 = vperm.xlu0 %723, %v598
    %v725 = vpop.permute.xlu0 %724
    %v727 = vsub.f32 %v519, %v650
    %v728 = vsub.f32 %v520, %v655
    %v729 = vsub.f32 %v521, %v660
    %v730 = vsub.f32 %v522, %v665
    %v731 = vsub.f32 %v523, %v670
    %v732 = vsub.f32 %v524, %v675
    %v733 = vsub.f32 %v525, %v680
    %v734 = vsub.f32 %v526, %v685
    %v735 = vsub.f32 %v527, %v690
    %v736 = vsub.f32 %v528, %v695
    %v737 = vsub.f32 %v529, %v700
    %v738 = vsub.f32 %v530, %v705
    %v739 = vsub.f32 %v531, %v710
    %v740 = vsub.f32 %v532, %v715
    %v741 = vsub.f32 %v533, %v720
    %v742 = vsub.f32 %v534, %v725
    %v743 = vmul.f32 %v727, 1.442695
    %v744 = vpow.pop %v743
    %v745 = vmul.f32 %v728, 1.442695
    %v746 = vpow.pop %v745
    %v747 = vmul.f32 %v729, 1.442695
    %v748 = vpow.pop %v747
    %v749 = vmul.f32 %v730, 1.442695
    %v750 = vpow.pop %v749
    %v751 = vmul.f32 %v731, 1.442695
    %v752 = vpow.pop %v751
    %v753 = vmul.f32 %v732, 1.442695
    %v754 = vpow.pop %v753
    %v755 = vmul.f32 %v733, 1.442695
    %v756 = vpow.pop %v755
    %v757 = vmul.f32 %v734, 1.442695
    %v758 = vpow.pop %v757
    %v759 = vmul.f32 %v735, 1.442695
    %v760 = vpow.pop %v759
    %v761 = vmul.f32 %v736, 1.442695
    %v762 = vpow.pop %v761
    %v763 = vmul.f32 %v737, 1.442695
    %v764 = vpow.pop %v763
    %v765 = vmul.f32 %v738, 1.442695
    %v766 = vpow.pop %v765
    %v767 = vmul.f32 %v739, 1.442695
    %v768 = vpow.pop %v767
    %v769 = vmul.f32 %v740, 1.442695
    %v770 = vpow.pop %v769
    %v771 = vmul.f32 %v741, 1.442695
    %v772 = vpow.pop %v771
    %v773 = vmul.f32 %v742, 1.442695
    %v774 = vpow.pop %v773
    %v775 = vmul.f32 %v744, %v370
    %v776 = vmul.f32 %v746, %v371
    %v777 = vmul.f32 %v748, %v372
    %v778 = vmul.f32 %v750, %v373
    %v779 = vmul.f32 %v752, %v374
    %v780 = vmul.f32 %v754, %v375
    %v781 = vmul.f32 %v756, %v376
    %v782 = vmul.f32 %v758, %v377
    %v783 = vmul.f32 %v760, %v378
    %v784 = vmul.f32 %v762, %v379
    %v785 = vmul.f32 %v764, %v380
    %v786 = vmul.f32 %v766, %v381
    %v787 = vmul.f32 %v768, %v382
    %v788 = vmul.f32 %v770, %v383
    %v789 = vmul.f32 %v772, %v384
    %v790 = vmul.f32 %v774, %v385
    %v791 = vld [vmem:[#allocation3] sm:$0xff]
    %v792 = vld [vmem:[#allocation3 + $0x8] sm:$0xff]
    %v793 = vld [vmem:[#allocation3 + $0x10] sm:$0xff]
    %v794 = vld [vmem:[#allocation3 + $0x18] sm:$0xff]
    %v795 = vld [vmem:[#allocation3 + $0x20] sm:$0xff]
    %v796 = vld [vmem:[#allocation3 + $0x28] sm:$0xff]
    %v797 = vld [vmem:[#allocation3 + $0x30] sm:$0xff]
    %v798 = vld [vmem:[#allocation3 + $0x38] sm:$0xff]
    %v799 = vld [vmem:[#allocation3 + $0x40] sm:$0xff]
    %v800 = vld [vmem:[#allocation3 + $0x48] sm:$0xff]
    %v801 = vld [vmem:[#allocation3 + $0x50] sm:$0xff]
    %v802 = vld [vmem:[#allocation3 + $0x58] sm:$0xff]
    %v803 = vld [vmem:[#allocation3 + $0x60] sm:$0xff]
    %v804 = vld [vmem:[#allocation3 + $0x68] sm:$0xff]
    %v805 = vld [vmem:[#allocation3 + $0x70] sm:$0xff]
    %v806 = vld [vmem:[#allocation3 + $0x78] sm:$0xff]
    %v807 = vmul.f32 %v616, %v791
    %v808 = vmul.f32 %v618, %v792
    %v809 = vmul.f32 %v620, %v793
    %v810 = vmul.f32 %v622, %v794
    %v811 = vmul.f32 %v624, %v795
    %v812 = vmul.f32 %v626, %v796
    %v813 = vmul.f32 %v628, %v797
    %v814 = vmul.f32 %v630, %v798
    %v815 = vmul.f32 %v632, %v799
    %v816 = vmul.f32 %v634, %v800
    %v817 = vmul.f32 %v636, %v801
    %v818 = vmul.f32 %v638, %v802
    %v819 = vmul.f32 %v640, %v803
    %v820 = vmul.f32 %v642, %v804
    %v821 = vmul.f32 %v644, %v805
    %v822 = vmul.f32 %v646, %v806
    %823 = vadd.xlane.f32.xlu0 %v775
    %v824 = vpop.xlane.xlu0 %823
    %825 = vadd.xlane.f32.xlu0 %v776
    %v826 = vpop.xlane.xlu0 %825
    %827 = vadd.xlane.f32.xlu0 %v777
    %v828 = vpop.xlane.xlu0 %827
    %829 = vadd.xlane.f32.xlu0 %v778
    %v830 = vpop.xlane.xlu0 %829
    %831 = vadd.xlane.f32.xlu0 %v779
    %v832 = vpop.xlane.xlu0 %831
    %833 = vadd.xlane.f32.xlu0 %v780
    %v834 = vpop.xlane.xlu0 %833
    %835 = vadd.xlane.f32.xlu0 %v781
    %v836 = vpop.xlane.xlu0 %835
    %837 = vadd.xlane.f32.xlu0 %v782
    %v838 = vpop.xlane.xlu0 %837
    %839 = vadd.xlane.f32.xlu0 %v783
    %v840 = vpop.xlane.xlu0 %839
    %841 = vadd.xlane.f32.xlu0 %v784
    %v842 = vpop.xlane.xlu0 %841
    %843 = vadd.xlane.f32.xlu0 %v785
    %v844 = vpop.xlane.xlu0 %843
    %845 = vadd.xlane.f32.xlu0 %v786
    %v846 = vpop.xlane.xlu0 %845
    %847 = vadd.xlane.f32.xlu0 %v787
    %v848 = vpop.xlane.xlu0 %847
    %849 = vadd.xlane.f32.xlu0 %v788
    %v850 = vpop.xlane.xlu0 %849
    %851 = vadd.xlane.f32.xlu0 %v789
    %v852 = vpop.xlane.xlu0 %851
    %853 = vadd.xlane.f32.xlu0 %v790
    %v854 = vpop.xlane.xlu0 %853
    %v855 = vadd.f32 %v807, %v824
    %v856 = vadd.f32 %v808, %v826
    %v857 = vadd.f32 %v809, %v828
    %v858 = vadd.f32 %v810, %v830
    %v859 = vadd.f32 %v811, %v832
    %v860 = vadd.f32 %v812, %v834
    %v861 = vadd.f32 %v813, %v836
    %v862 = vadd.f32 %v814, %v838
    %v863 = vadd.f32 %v815, %v840
    %v864 = vadd.f32 %v816, %v842
    %v865 = vadd.f32 %v817, %v844
    %v866 = vadd.f32 %v818, %v846
    %v867 = vadd.f32 %v819, %v848
    %v868 = vadd.f32 %v820, %v850
    %v869 = vadd.f32 %v821, %v852
    %v870 = vadd.f32 %v822, %v854
    %vm871 = vcmask 7168
    %872 = vst.msk [vmem:[#allocation3] sm:$0xff] %vm871, %v855
    %873 = vst.msk [vmem:[#allocation3 + $0x8] sm:$0xff] %vm871, %v856
    %874 = vst.msk [vmem:[#allocation3 + $0x10] sm:$0xff] %vm871, %v857
    %875 = vst.msk [vmem:[#allocation3 + $0x18] sm:$0xff] %vm871, %v858
    %876 = vst.msk [vmem:[#allocation3 + $0x20] sm:$0xff] %vm871, %v859
    %877 = vst.msk [vmem:[#allocation3 + $0x28] sm:$0xff] %vm871, %v860
    %878 = vst.msk [vmem:[#allocation3 + $0x30] sm:$0xff] %vm871, %v861
    %879 = vst.msk [vmem:[#allocation3 + $0x38] sm:$0xff] %vm871, %v862
    %880 = vst.msk [vmem:[#allocation3 + $0x40] sm:$0xff] %vm871, %v863
    %881 = vst.msk [vmem:[#allocation3 + $0x48] sm:$0xff] %vm871, %v864
    %882 = vst.msk [vmem:[#allocation3 + $0x50] sm:$0xff] %vm871, %v865
    %883 = vst.msk [vmem:[#allocation3 + $0x58] sm:$0xff] %vm871, %v866
    %884 = vst.msk [vmem:[#allocation3 + $0x60] sm:$0xff] %vm871, %v867
    %885 = vst.msk [vmem:[#allocation3 + $0x68] sm:$0xff] %vm871, %v868
    %886 = vst.msk [vmem:[#allocation3 + $0x70] sm:$0xff] %vm871, %v869
    %887 = vst.msk [vmem:[#allocation3 + $0x78] sm:$0xff] %vm871, %v870
    %888 = vst.msk [vmem:[#allocation2] sm:$0xff] %vm871, %v583
    %889 = vst.msk [vmem:[#allocation2 + $0x8] sm:$0xff] %vm871, %v584
    %890 = vst.msk [vmem:[#allocation2 + $0x10] sm:$0xff] %vm871, %v585
    %891 = vst.msk [vmem:[#allocation2 + $0x18] sm:$0xff] %vm871, %v586
    %892 = vst.msk [vmem:[#allocation2 + $0x20] sm:$0xff] %vm871, %v587
    %893 = vst.msk [vmem:[#allocation2 + $0x28] sm:$0xff] %vm871, %v588
    %894 = vst.msk [vmem:[#allocation2 + $0x30] sm:$0xff] %vm871, %v589
    %895 = vst.msk [vmem:[#allocation2 + $0x38] sm:$0xff] %vm871, %v590
    %896 = vst.msk [vmem:[#allocation2 + $0x40] sm:$0xff] %vm871, %v591
    %897 = vst.msk [vmem:[#allocation2 + $0x48] sm:$0xff] %vm871, %v592
    %898 = vst.msk [vmem:[#allocation2 + $0x50] sm:$0xff] %vm871, %v593
    %899 = vst.msk [vmem:[#allocation2 + $0x58] sm:$0xff] %vm871, %v594
    %900 = vst.msk [vmem:[#allocation2 + $0x60] sm:$0xff] %vm871, %v595
    %901 = vst.msk [vmem:[#allocation2 + $0x68] sm:$0xff] %vm871, %v596
    %902 = vst.msk [vmem:[#allocation2 + $0x70] sm:$0xff] %vm871, %v597
    %903 = vst.msk [vmem:[#allocation2 + $0x78] sm:$0xff] %vm871, %v598
    %v904 = vld [vmem:[#allocation4] sm:$0xff]
    %v905 = vld [vmem:[#allocation4 + $0x8] sm:$0xff]
    %v906 = vld [vmem:[#allocation4 + $0x10] sm:$0xff]
    %v907 = vld [vmem:[#allocation4 + $0x18] sm:$0xff]
    %v908 = vld [vmem:[#allocation4 + $0x20] sm:$0xff]
    %v909 = vld [vmem:[#allocation4 + $0x28] sm:$0xff]
    %v910 = vld [vmem:[#allocation4 + $0x30] sm:$0xff]
    %v911 = vld [vmem:[#allocation4 + $0x38] sm:$0xff]
    %v912 = vld [vmem:[#allocation4 + $0x40] sm:$0xff]
    %v913 = vld [vmem:[#allocation4 + $0x48] sm:$0xff]
    %v914 = vld [vmem:[#allocation4 + $0x50] sm:$0xff]
    %v915 = vld [vmem:[#allocation4 + $0x58] sm:$0xff]
    %v916 = vld [vmem:[#allocation4 + $0x60] sm:$0xff]
    %v917 = vld [vmem:[#allocation4 + $0x68] sm:$0xff]
    %v918 = vld [vmem:[#allocation4 + $0x70] sm:$0xff]
    %v919 = vld [vmem:[#allocation4 + $0x78] sm:$0xff]
    %v920 = vmul.f32 %v503, %v199
    %v921 = vmul.f32 %v504, %v204
    %v922 = vmul.f32 %v505, %v209
    %v923 = vmul.f32 %v506, %v214
    %v924 = vmul.f32 %v507, %v219
    %v925 = vmul.f32 %v508, %v224
    %v926 = vmul.f32 %v509, %v229
    %v927 = vmul.f32 %v510, %v234
    %v928 = vmul.f32 %v511, %v239
    %v929 = vmul.f32 %v512, %v244
    %v930 = vmul.f32 %v513, %v249
    %v931 = vmul.f32 %v514, %v254
    %v932 = vmul.f32 %v515, %v259
    %v933 = vmul.f32 %v516, %v264
    %v934 = vmul.f32 %v517, %v269
    %v935 = vmul.f32 %v518, %v274
    %936 = vadd.xlane.f32.xlu0 %v920
    %v937 = vpop.xlane.xlu0 %936
    %938 = vadd.xlane.f32.xlu0 %v921
    %v939 = vpop.xlane.xlu0 %938
    %940 = vadd.xlane.f32.xlu0 %v922
    %v941 = vpop.xlane.xlu0 %940
    %942 = vadd.xlane.f32.xlu0 %v923
    %v943 = vpop.xlane.xlu0 %942
    %944 = vadd.xlane.f32.xlu0 %v924
    %v945 = vpop.xlane.xlu0 %944
    %946 = vadd.xlane.f32.xlu0 %v925
    %v947 = vpop.xlane.xlu0 %946
    %948 = vadd.xlane.f32.xlu0 %v926
    %v949 = vpop.xlane.xlu0 %948
    %950 = vadd.xlane.f32.xlu0 %v927
    %v951 = vpop.xlane.xlu0 %950
    %952 = vadd.xlane.f32.xlu0 %v928
    %v953 = vpop.xlane.xlu0 %952
    %954 = vadd.xlane.f32.xlu0 %v929
    %v955 = vpop.xlane.xlu0 %954
    %956 = vadd.xlane.f32.xlu0 %v930
    %v957 = vpop.xlane.xlu0 %956
    %958 = vadd.xlane.f32.xlu0 %v931
    %v959 = vpop.xlane.xlu0 %958
    %960 = vadd.xlane.f32.xlu0 %v932
    %v961 = vpop.xlane.xlu0 %960
    %962 = vadd.xlane.f32.xlu0 %v933
    %v963 = vpop.xlane.xlu0 %962
    %964 = vadd.xlane.f32.xlu0 %v934
    %v965 = vpop.xlane.xlu0 %964
    %966 = vadd.xlane.f32.xlu0 %v935
    %v967 = vpop.xlane.xlu0 %966
    %v968 = vadd.f32 %v904, %v937
    %v969 = vadd.f32 %v905, %v939
    %v970 = vadd.f32 %v906, %v941
    %v971 = vadd.f32 %v907, %v943
    %v972 = vadd.f32 %v908, %v945
    %v973 = vadd.f32 %v909, %v947
    %v974 = vadd.f32 %v910, %v949
    %v975 = vadd.f32 %v911, %v951
    %v976 = vadd.f32 %v912, %v953
    %v977 = vadd.f32 %v913, %v955
    %v978 = vadd.f32 %v914, %v957
    %v979 = vadd.f32 %v915, %v959
    %v980 = vadd.f32 %v916, %v961
    %v981 = vadd.f32 %v917, %v963
    %v982 = vadd.f32 %v918, %v965
    %v983 = vadd.f32 %v919, %v967
    %984 = vst.msk [vmem:[#allocation4] sm:$0xff] %vm871, %v968
    %985 = vst.msk [vmem:[#allocation4 + $0x8] sm:$0xff] %vm871, %v969
    %986 = vst.msk [vmem:[#allocation4 + $0x10] sm:$0xff] %vm871, %v970
    %987 = vst.msk [vmem:[#allocation4 + $0x18] sm:$0xff] %vm871, %v971
    %988 = vst.msk [vmem:[#allocation4 + $0x20] sm:$0xff] %vm871, %v972
    %989 = vst.msk [vmem:[#allocation4 + $0x28] sm:$0xff] %vm871, %v973
    %990 = vst.msk [vmem:[#allocation4 + $0x30] sm:$0xff] %vm871, %v974
    %991 = vst.msk [vmem:[#allocation4 + $0x38] sm:$0xff] %vm871, %v975
    %992 = vst.msk [vmem:[#allocation4 + $0x40] sm:$0xff] %vm871, %v976
    %993 = vst.msk [vmem:[#allocation4 + $0x48] sm:$0xff] %vm871, %v977
    %994 = vst.msk [vmem:[#allocation4 + $0x50] sm:$0xff] %vm871, %v978
    %995 = vst.msk [vmem:[#allocation4 + $0x58] sm:$0xff] %vm871, %v979
    %996 = vst.msk [vmem:[#allocation4 + $0x60] sm:$0xff] %vm871, %v980
    %997 = vst.msk [vmem:[#allocation4 + $0x68] sm:$0xff] %vm871, %v981
    %998 = vst.msk [vmem:[#allocation4 + $0x70] sm:$0xff] %vm871, %v982
    %999 = vst.msk [vmem:[#allocation4 + $0x78] sm:$0xff] %vm871, %v983
    %v1000 = vld [vmem:[#allocation5] sm:$0xff]
    %v1001 = vld [vmem:[#allocation5 + $0x8] sm:$0xff]
    %v1002 = vld [vmem:[#allocation5 + $0x10] sm:$0xff]
    %v1003 = vld [vmem:[#allocation5 + $0x18] sm:$0xff]
    %v1004 = vld [vmem:[#allocation5 + $0x20] sm:$0xff]
    %v1005 = vld [vmem:[#allocation5 + $0x28] sm:$0xff]
    %v1006 = vld [vmem:[#allocation5 + $0x30] sm:$0xff]
    %v1007 = vld [vmem:[#allocation5 + $0x38] sm:$0xff]
    %v1008 = vld [vmem:[#allocation5 + $0x40] sm:$0xff]
    %v1009 = vld [vmem:[#allocation5 + $0x48] sm:$0xff]
    %v1010 = vld [vmem:[#allocation5 + $0x50] sm:$0xff]
    %v1011 = vld [vmem:[#allocation5 + $0x58] sm:$0xff]
    %v1012 = vld [vmem:[#allocation5 + $0x60] sm:$0xff]
    %v1013 = vld [vmem:[#allocation5 + $0x68] sm:$0xff]
    %v1014 = vld [vmem:[#allocation5 + $0x70] sm:$0xff]
    %v1015 = vld [vmem:[#allocation5 + $0x78] sm:$0xff]
    %1016 = vadd.xlane.f32.xlu0 %v503
    %v1017 = vpop.xlane.xlu0 %1016
    %1018 = vadd.xlane.f32.xlu0 %v504
    %v1019 = vpop.xlane.xlu0 %1018
    %1020 = vadd.xlane.f32.xlu0 %v505
    %v1021 = vpop.xlane.xlu0 %1020
    %1022 = vadd.xlane.f32.xlu0 %v506
    %v1023 = vpop.xlane.xlu0 %1022
    %1024 = vadd.xlane.f32.xlu0 %v507
    %v1025 = vpop.xlane.xlu0 %1024
    %1026 = vadd.xlane.f32.xlu0 %v508
    %v1027 = vpop.xlane.xlu0 %1026
    %1028 = vadd.xlane.f32.xlu0 %v509
    %v1029 = vpop.xlane.xlu0 %1028
    %1030 = vadd.xlane.f32.xlu0 %v510
    %v1031 = vpop.xlane.xlu0 %1030
    %1032 = vadd.xlane.f32.xlu0 %v511
    %v1033 = vpop.xlane.xlu0 %1032
    %1034 = vadd.xlane.f32.xlu0 %v512
    %v1035 = vpop.xlane.xlu0 %1034
    %1036 = vadd.xlane.f32.xlu0 %v513
    %v1037 = vpop.xlane.xlu0 %1036
    %1038 = vadd.xlane.f32.xlu0 %v514
    %v1039 = vpop.xlane.xlu0 %1038
    %1040 = vadd.xlane.f32.xlu0 %v515
    %v1041 = vpop.xlane.xlu0 %1040
    %1042 = vadd.xlane.f32.xlu0 %v516
    %v1043 = vpop.xlane.xlu0 %1042
    %1044 = vadd.xlane.f32.xlu0 %v517
    %v1045 = vpop.xlane.xlu0 %1044
    %1046 = vadd.xlane.f32.xlu0 %v518
    %v1047 = vpop.xlane.xlu0 %1046
    %v1048 = vadd.f32 %v1000, %v1017
    %v1049 = vadd.f32 %v1001, %v1019
    %v1050 = vadd.f32 %v1002, %v1021
    %v1051 = vadd.f32 %v1003, %v1023
    %v1052 = vadd.f32 %v1004, %v1025
    %v1053 = vadd.f32 %v1005, %v1027
    %v1054 = vadd.f32 %v1006, %v1029
    %v1055 = vadd.f32 %v1007, %v1031
    %v1056 = vadd.f32 %v1008, %v1033
    %v1057 = vadd.f32 %v1009, %v1035
    %v1058 = vadd.f32 %v1010, %v1037
    %v1059 = vadd.f32 %v1011, %v1039
    %v1060 = vadd.f32 %v1012, %v1041
    %v1061 = vadd.f32 %v1013, %v1043
    %v1062 = vadd.f32 %v1014, %v1045
    %v1063 = vadd.f32 %v1015, %v1047
    %1064 = vst.msk [vmem:[#allocation5] sm:$0xff] %vm871, %v1048
    %1065 = vst.msk [vmem:[#allocation5 + $0x8] sm:$0xff] %vm871, %v1049
    %1066 = vst.msk [vmem:[#allocation5 + $0x10] sm:$0xff] %vm871, %v1050
    %1067 = vst.msk [vmem:[#allocation5 + $0x18] sm:$0xff] %vm871, %v1051
    %1068 = vst.msk [vmem:[#allocation5 + $0x20] sm:$0xff] %vm871, %v1052
    %1069 = vst.msk [vmem:[#allocation5 + $0x28] sm:$0xff] %vm871, %v1053
    %1070 = vst.msk [vmem:[#allocation5 + $0x30] sm:$0xff] %vm871, %v1054
    %1071 = vst.msk [vmem:[#allocation5 + $0x38] sm:$0xff] %vm871, %v1055
    %1072 = vst.msk [vmem:[#allocation5 + $0x40] sm:$0xff] %vm871, %v1056
    %1073 = vst.msk [vmem:[#allocation5 + $0x48] sm:$0xff] %vm871, %v1057
    %1074 = vst.msk [vmem:[#allocation5 + $0x50] sm:$0xff] %vm871, %v1058
    %1075 = vst.msk [vmem:[#allocation5 + $0x58] sm:$0xff] %vm871, %v1059
    %1076 = vst.msk [vmem:[#allocation5 + $0x60] sm:$0xff] %vm871, %v1060
    %1077 = vst.msk [vmem:[#allocation5 + $0x68] sm:$0xff] %vm871, %v1061
    %1078 = vst.msk [vmem:[#allocation5 + $0x70] sm:$0xff] %vm871, %v1062
    %1079 = vst.msk [vmem:[#allocation5 + $0x78] sm:$0xff] %vm871, %v1063
    // Predicated region
    $region26: #{tpu_custom_call.1} parent=1 // pred_check
      %p1080 = pneg %p31
    $region27: #{tpu_custom_call.1} parent=1 // pred_check_branch
      %1082 = sbr.rel (%p1080) target = $region29
    $region28: #{tpu_custom_call.1} parent=1 // pred_region
      %vm1083 = vcmp.lt.s32.totalorder %v296, 16
      %vm1084 = vcmp.lt.s32.totalorder %v297, 16
      %vm1085 = vcmp.lt.s32.totalorder %v298, 16
      %vm1086 = vcmp.lt.s32.totalorder %v299, 16
      %vm1087 = vcmp.lt.s32.totalorder %v300, 16
      %vm1088 = vcmp.lt.s32.totalorder %v301, 16
      %vm1089 = vcmp.lt.s32.totalorder %v302, 16
      %vm1090 = vcmp.lt.s32.totalorder %v303, 16
      %vm1091 = vcmp.lt.s32.totalorder %v304, 16
      %vm1092 = vcmp.lt.s32.totalorder %v305, 16
      %vm1093 = vcmp.lt.s32.totalorder %v306, 16
      %vm1094 = vcmp.lt.s32.totalorder %v307, 16
      %vm1095 = vcmp.lt.s32.totalorder %v308, 16
      %vm1096 = vcmp.lt.s32.totalorder %v309, 16
      %vm1097 = vcmp.lt.s32.totalorder %v310, 16
      %vm1098 = vcmp.lt.s32.totalorder %v311, 16
      %v1099 = vsel %vm1083, 1, 0
      %v1100 = vsel %vm1084, 1, 0
      %v1101 = vsel %vm1085, 1, 0
      %v1102 = vsel %vm1086, 1, 0
      %v1103 = vsel %vm1087, 1, 0
      %v1104 = vsel %vm1088, 1, 0
      %v1105 = vsel %vm1089, 1, 0
      %v1106 = vsel %vm1090, 1, 0
      %v1107 = vsel %vm1091, 1, 0
      %v1108 = vsel %vm1092, 1, 0
      %v1109 = vsel %vm1093, 1, 0
      %v1110 = vsel %vm1094, 1, 0
      %v1111 = vsel %vm1095, 1, 0
      %v1112 = vsel %vm1096, 1, 0
      %v1113 = vsel %vm1097, 1, 0
      %v1114 = vsel %vm1098, 1, 0
      %v1115 = vcvt.s32.f32 %v1099
      %v1116 = vcvt.s32.f32 %v1100
      %v1117 = vcvt.s32.f32 %v1101
      %v1118 = vcvt.s32.f32 %v1102
      %v1119 = vcvt.s32.f32 %v1103
      %v1120 = vcvt.s32.f32 %v1104
      %v1121 = vcvt.s32.f32 %v1105
      %v1122 = vcvt.s32.f32 %v1106
      %v1123 = vcvt.s32.f32 %v1107
      %v1124 = vcvt.s32.f32 %v1108
      %v1125 = vcvt.s32.f32 %v1109
      %v1126 = vcvt.s32.f32 %v1110
      %v1127 = vcvt.s32.f32 %v1111
      %v1128 = vcvt.s32.f32 %v1112
      %v1129 = vcvt.s32.f32 %v1113
      %v1130 = vcvt.s32.f32 %v1114
      %v1131 = vld [vmem:[#allocation2] sm:$0xff]
      %v1132 = vld [vmem:[#allocation2 + $0x8] sm:$0xff]
      %v1133 = vld [vmem:[#allocation2 + $0x10] sm:$0xff]
      %v1134 = vld [vmem:[#allocation2 + $0x18] sm:$0xff]
      %v1135 = vld [vmem:[#allocation2 + $0x20] sm:$0xff]
      %v1136 = vld [vmem:[#allocation2 + $0x28] sm:$0xff]
      %v1137 = vld [vmem:[#allocation2 + $0x30] sm:$0xff]
      %v1138 = vld [vmem:[#allocation2 + $0x38] sm:$0xff]
      %v1139 = vld [vmem:[#allocation2 + $0x40] sm:$0xff]
      %v1140 = vld [vmem:[#allocation2 + $0x48] sm:$0xff]
      %v1141 = vld [vmem:[#allocation2 + $0x50] sm:$0xff]
      %v1142 = vld [vmem:[#allocation2 + $0x58] sm:$0xff]
      %v1143 = vld [vmem:[#allocation2 + $0x60] sm:$0xff]
      %v1144 = vld [vmem:[#allocation2 + $0x68] sm:$0xff]
      %v1145 = vld [vmem:[#allocation2 + $0x70] sm:$0xff]
      %v1146 = vld [vmem:[#allocation2 + $0x78] sm:$0xff]
      %v1147 = vld [vmem:[#allocation3] sm:$0xff]
      %v1148 = vld [vmem:[#allocation3 + $0x8] sm:$0xff]
      %v1149 = vld [vmem:[#allocation3 + $0x10] sm:$0xff]
      %v1150 = vld [vmem:[#allocation3 + $0x18] sm:$0xff]
      %v1151 = vld [vmem:[#allocation3 + $0x20] sm:$0xff]
      %v1152 = vld [vmem:[#allocation3 + $0x28] sm:$0xff]
      %v1153 = vld [vmem:[#allocation3 + $0x30] sm:$0xff]
      %v1154 = vld [vmem:[#allocation3 + $0x38] sm:$0xff]
      %v1155 = vld [vmem:[#allocation3 + $0x40] sm:$0xff]
      %v1156 = vld [vmem:[#allocation3 + $0x48] sm:$0xff]
      %v1157 = vld [vmem:[#allocation3 + $0x50] sm:$0xff]
      %v1158 = vld [vmem:[#allocation3 + $0x58] sm:$0xff]
      %v1159 = vld [vmem:[#allocation3 + $0x60] sm:$0xff]
      %v1160 = vld [vmem:[#allocation3 + $0x68] sm:$0xff]
      %v1161 = vld [vmem:[#allocation3 + $0x70] sm:$0xff]
      %v1162 = vld [vmem:[#allocation3 + $0x78] sm:$0xff]
      %v1163 = vlog2.pop %v1147
      %v1164 = vmul.f32 %v1163, 0.6931472
      %v1165 = vlog2.pop %v1148
      %v1166 = vmul.f32 %v1165, 0.6931472
      %v1167 = vlog2.pop %v1149
      %v1168 = vmul.f32 %v1167, 0.6931472
      %v1169 = vlog2.pop %v1150
      %v1170 = vmul.f32 %v1169, 0.6931472
      %v1171 = vlog2.pop %v1151
      %v1172 = vmul.f32 %v1171, 0.6931472
      %v1173 = vlog2.pop %v1152
      %v1174 = vmul.f32 %v1173, 0.6931472
      %v1175 = vlog2.pop %v1153
      %v1176 = vmul.f32 %v1175, 0.6931472
      %v1177 = vlog2.pop %v1154
      %v1178 = vmul.f32 %v1177, 0.6931472
      %v1179 = vlog2.pop %v1155
      %v1180 = vmul.f32 %v1179, 0.6931472
      %v1181 = vlog2.pop %v1156
      %v1182 = vmul.f32 %v1181, 0.6931472
      %v1183 = vlog2.pop %v1157
      %v1184 = vmul.f32 %v1183, 0.6931472
      %v1185 = vlog2.pop %v1158
      %v1186 = vmul.f32 %v1185, 0.6931472
      %v1187 = vlog2.pop %v1159
      %v1188 = vmul.f32 %v1187, 0.6931472
      %v1189 = vlog2.pop %v1160
      %v1190 = vmul.f32 %v1189, 0.6931472
      %v1191 = vlog2.pop %v1161
      %v1192 = vmul.f32 %v1191, 0.6931472
      %v1193 = vlog2.pop %v1162
      %v1194 = vmul.f32 %v1193, 0.6931472
      %v1195 = vadd.f32 %v1131, %v1164
      %v1196 = vadd.f32 %v1132, %v1166
      %v1197 = vadd.f32 %v1133, %v1168
      %v1198 = vadd.f32 %v1134, %v1170
      %v1199 = vadd.f32 %v1135, %v1172
      %v1200 = vadd.f32 %v1136, %v1174
      %v1201 = vadd.f32 %v1137, %v1176
      %v1202 = vadd.f32 %v1138, %v1178
      %v1203 = vadd.f32 %v1139, %v1180
      %v1204 = vadd.f32 %v1140, %v1182
      %v1205 = vadd.f32 %v1141, %v1184
      %v1206 = vadd.f32 %v1142, %v1186
      %v1207 = vadd.f32 %v1143, %v1188
      %v1208 = vadd.f32 %v1144, %v1190
      %v1209 = vadd.f32 %v1145, %v1192
      %v1210 = vadd.f32 %v1146, %v1194
      %v1211 = vld [vmem:[#allocation5] sm:$0xff]
      %v1212 = vld [vmem:[#allocation5 + $0x8] sm:$0xff]
      %v1213 = vld [vmem:[#allocation5 + $0x10] sm:$0xff]
      %v1214 = vld [vmem:[#allocation5 + $0x18] sm:$0xff]
      %v1215 = vld [vmem:[#allocation5 + $0x20] sm:$0xff]
      %v1216 = vld [vmem:[#allocation5 + $0x28] sm:$0xff]
      %v1217 = vld [vmem:[#allocation5 + $0x30] sm:$0xff]
      %v1218 = vld [vmem:[#allocation5 + $0x38] sm:$0xff]
      %v1219 = vld [vmem:[#allocation5 + $0x40] sm:$0xff]
      %v1220 = vld [vmem:[#allocation5 + $0x48] sm:$0xff]
      %v1221 = vld [vmem:[#allocation5 + $0x50] sm:$0xff]
      %v1222 = vld [vmem:[#allocation5 + $0x58] sm:$0xff]
      %v1223 = vld [vmem:[#allocation5 + $0x60] sm:$0xff]
      %v1224 = vld [vmem:[#allocation5 + $0x68] sm:$0xff]
      %v1225 = vld [vmem:[#allocation5 + $0x70] sm:$0xff]
      %v1226 = vld [vmem:[#allocation5 + $0x78] sm:$0xff]
      %v1227 = vmax.f32 %v1211, 1.0
      %v1228 = vmax.f32 %v1212, 1.0
      %v1229 = vmax.f32 %v1213, 1.0
      %v1230 = vmax.f32 %v1214, 1.0
      %v1231 = vmax.f32 %v1215, 1.0
      %v1232 = vmax.f32 %v1216, 1.0
      %v1233 = vmax.f32 %v1217, 1.0
      %v1234 = vmax.f32 %v1218, 1.0
      %v1235 = vmax.f32 %v1219, 1.0
      %v1236 = vmax.f32 %v1220, 1.0
      %v1237 = vmax.f32 %v1221, 1.0
      %v1238 = vmax.f32 %v1222, 1.0
      %v1239 = vmax.f32 %v1223, 1.0
      %v1240 = vmax.f32 %v1224, 1.0
      %v1241 = vmax.f32 %v1225, 1.0
      %v1242 = vmax.f32 %v1226, 1.0
      %v1243 = vld [vmem:[#allocation4] sm:$0xff]
      %v1244 = vld [vmem:[#allocation4 + $0x8] sm:$0xff]
      %v1245 = vld [vmem:[#allocation4 + $0x10] sm:$0xff]
      %v1246 = vld [vmem:[#allocation4 + $0x18] sm:$0xff]
      %v1247 = vld [vmem:[#allocation4 + $0x20] sm:$0xff]
      %v1248 = vld [vmem:[#allocation4 + $0x28] sm:$0xff]
      %v1249 = vld [vmem:[#allocation4 + $0x30] sm:$0xff]
      %v1250 = vld [vmem:[#allocation4 + $0x38] sm:$0xff]
      %v1251 = vld [vmem:[#allocation4 + $0x40] sm:$0xff]
      %v1252 = vld [vmem:[#allocation4 + $0x48] sm:$0xff]
      %v1253 = vld [vmem:[#allocation4 + $0x50] sm:$0xff]
      %v1254 = vld [vmem:[#allocation4 + $0x58] sm:$0xff]
      %v1255 = vld [vmem:[#allocation4 + $0x60] sm:$0xff]
      %v1256 = vld [vmem:[#allocation4 + $0x68] sm:$0xff]
      %v1257 = vld [vmem:[#allocation4 + $0x70] sm:$0xff]
      %v1258 = vld [vmem:[#allocation4 + $0x78] sm:$0xff]
      %v1259 = vrcp.pop %v1227
      %v1260 = vmul.f32 %v1243, %v1259
      %v1261 = vrcp.pop %v1228
      %v1262 = vmul.f32 %v1244, %v1261
      %v1263 = vrcp.pop %v1229
      %v1264 = vmul.f32 %v1245, %v1263
      %v1265 = vrcp.pop %v1230
      %v1266 = vmul.f32 %v1246, %v1265
      %v1267 = vrcp.pop %v1231
      %v1268 = vmul.f32 %v1247, %v1267
      %v1269 = vrcp.pop %v1232
      %v1270 = vmul.f32 %v1248, %v1269
      %v1271 = vrcp.pop %v1233
      %v1272 = vmul.f32 %v1249, %v1271
      %v1273 = vrcp.pop %v1234
      %v1274 = vmul.f32 %v1250, %v1273
      %v1275 = vrcp.pop %v1235
      %v1276 = vmul.f32 %v1251, %v1275
      %v1277 = vrcp.pop %v1236
      %v1278 = vmul.f32 %v1252, %v1277
      %v1279 = vrcp.pop %v1237
      %v1280 = vmul.f32 %v1253, %v1279
      %v1281 = vrcp.pop %v1238
      %v1282 = vmul.f32 %v1254, %v1281
      %v1283 = vrcp.pop %v1239
      %v1284 = vmul.f32 %v1255, %v1283
      %v1285 = vrcp.pop %v1240
      %v1286 = vmul.f32 %v1256, %v1285
      %v1287 = vrcp.pop %v1241
      %v1288 = vmul.f32 %v1257, %v1287
      %v1289 = vrcp.pop %v1242
      %v1290 = vmul.f32 %v1258, %v1289
      %v1291 = vsub.f32 %v1260, %v1195
      %v1292 = vsub.f32 %v1262, %v1196
      %v1293 = vsub.f32 %v1264, %v1197
      %v1294 = vsub.f32 %v1266, %v1198
      %v1295 = vsub.f32 %v1268, %v1199
      %v1296 = vsub.f32 %v1270, %v1200
      %v1297 = vsub.f32 %v1272, %v1201
      %v1298 = vsub.f32 %v1274, %v1202
      %v1299 = vsub.f32 %v1276, %v1203
      %v1300 = vsub.f32 %v1278, %v1204
      %v1301 = vsub.f32 %v1280, %v1205
      %v1302 = vsub.f32 %v1282, %v1206
      %v1303 = vsub.f32 %v1284, %v1207
      %v1304 = vsub.f32 %v1286, %v1208
      %v1305 = vsub.f32 %v1288, %v1209
      %v1306 = vsub.f32 %v1290, %v1210
      %v1307 = vmul.f32 %v1291, -1.0
      %v1308 = vmul.f32 %v1292, -1.0
      %v1309 = vmul.f32 %v1293, -1.0
      %v1310 = vmul.f32 %v1294, -1.0
      %v1311 = vmul.f32 %v1295, -1.0
      %v1312 = vmul.f32 %v1296, -1.0
      %v1313 = vmul.f32 %v1297, -1.0
      %v1314 = vmul.f32 %v1298, -1.0
      %v1315 = vmul.f32 %v1299, -1.0
      %v1316 = vmul.f32 %v1300, -1.0
      %v1317 = vmul.f32 %v1301, -1.0
      %v1318 = vmul.f32 %v1302, -1.0
      %v1319 = vmul.f32 %v1303, -1.0
      %v1320 = vmul.f32 %v1304, -1.0
      %v1321 = vmul.f32 %v1305, -1.0
      %v1322 = vmul.f32 %v1306, -1.0
      %v1323 = vmul.f32 %v1307, %v1115
      %v1324 = vmul.f32 %v1308, %v1116
      %v1325 = vmul.f32 %v1309, %v1117
      %v1326 = vmul.f32 %v1310, %v1118
      %v1327 = vmul.f32 %v1311, %v1119
      %v1328 = vmul.f32 %v1312, %v1120
      %v1329 = vmul.f32 %v1313, %v1121
      %v1330 = vmul.f32 %v1314, %v1122
      %v1331 = vmul.f32 %v1315, %v1123
      %v1332 = vmul.f32 %v1316, %v1124
      %v1333 = vmul.f32 %v1317, %v1125
      %v1334 = vmul.f32 %v1318, %v1126
      %v1335 = vmul.f32 %v1319, %v1127
      %v1336 = vmul.f32 %v1320, %v1128
      %v1337 = vmul.f32 %v1321, %v1129
      %v1338 = vmul.f32 %v1322, %v1130
      %1339 = vst.msk [vmem:[%s4] sm:$0xff] %vm871, %v1323
      %1340 = vst.msk [vmem:[%s4 + $0x8] sm:$0xff] %vm871, %v1324
      %1341 = vst.msk [vmem:[%s4 + $0x10] sm:$0xff] %vm871, %v1325
      %1342 = vst.msk [vmem:[%s4 + $0x18] sm:$0xff] %vm871, %v1326
      %1343 = vst.msk [vmem:[%s4 + $0x20] sm:$0xff] %vm871, %v1327
      %1344 = vst.msk [vmem:[%s4 + $0x28] sm:$0xff] %vm871, %v1328
      %1345 = vst.msk [vmem:[%s4 + $0x30] sm:$0xff] %vm871, %v1329
      %1346 = vst.msk [vmem:[%s4 + $0x38] sm:$0xff] %vm871, %v1330
      %1347 = vst.msk [vmem:[%s4 + $0x40] sm:$0xff] %vm871, %v1331
      %1348 = vst.msk [vmem:[%s4 + $0x48] sm:$0xff] %vm871, %v1332
      %1349 = vst.msk [vmem:[%s4 + $0x50] sm:$0xff] %vm871, %v1333
      %1350 = vst.msk [vmem:[%s4 + $0x58] sm:$0xff] %vm871, %v1334
      %1351 = vst.msk [vmem:[%s4 + $0x60] sm:$0xff] %vm871, %v1335
      %1352 = vst.msk [vmem:[%s4 + $0x68] sm:$0xff] %vm871, %v1336
      %1353 = vst.msk [vmem:[%s4 + $0x70] sm:$0xff] %vm871, %v1337
      %1354 = vst.msk [vmem:[%s4 + $0x78] sm:$0xff] %vm871, %v1338
    $region29: #{tpu_custom_call.1} parent=1 // pred_fallthru
      _
    // Predicated region
    $region30: #{tpu_custom_call.1} parent=1 // pred_check
      _
    $region31: #{tpu_custom_call.1} parent=1 // pred_check_branch
      %1356 = sbr.rel (0) target = $region33
    $region32: #{tpu_custom_call.1} parent=1 // pred_region
      _
    $region33: #{tpu_custom_call.1} parent=1 // pred_fallthru
      _
    // Predicated region
    $region34: #{tpu_custom_call.1} parent=1 // pred_check
      _
    $region35: #{tpu_custom_call.1} parent=1 // pred_check_branch
      %1358 = sbr.rel (0) target = $region37
    $region36: #{tpu_custom_call.1} parent=1 // pred_region
      _
    $region37: #{tpu_custom_call.1} parent=1 // pred_fallthru
      _
    %1359 = vsyncpa [#allocation7], 1

</llo_original>
